<compile_context>
chip_gen: v7x
topology: tpu7x:2x2x1
jax: 0.10.0
libtpu: 0.0.40
codegen_flags: <defaults>
</compile_context>

<pallas_src>
import jax
import jax.numpy as jnp
from jax.experimental import pallas as pl
from jax.experimental.pallas import tpu as pltpu

# ----------------------------------------------------------------------------
# Synthetic stand-ins for the repo constants `aic_bones` / `aic_bone_pairs`
# (only their lengths matter: num_input = len(aic_bones) + 2 * len(aic_bone_pairs)).
# ----------------------------------------------------------------------------
AIC_BONES = list(range(8))        # len = 8
AIC_BONE_PAIRS = list(range(4))   # len = 4
NUM_INPUT = len(AIC_BONES) + 2 * len(AIC_BONE_PAIRS)   # 16 input features per frame

NUM_HIDDEN = 48                   # self.num_hidden
NUM_OUTPUT = 9                    # self.num_output
C_BRANCH = 16                     # channels per multi-scale conv branch
CONV_KS = (1, 3, 5)               # multi-scale temporal kernel sizes
C_CONV = C_BRANCH * len(CONV_KS)  # 48 = LSTM input size
MAX_K = max(CONV_KS)              # 5 taps after fusing the branches
MAX_PAD = (MAX_K - 1) // 2        # 2

KC_PAD = 128                      # im2col lanes  (MAX_K * NUM_INPUT = 80  -> 128)
CC_PAD = 128                      # conv feature lanes (C_CONV = 48 -> 128)
H_PAD = 128                       # hidden lanes  (48 -> 128): gate slices 128-aligned
O_PAD = 128                       # class lanes   (9 -> 128): lane-dense output store
B_TILE = 8                        # batch padded / tiled to a full sublane width


# ----------------------------------------------------------------------------
# Fused kernel: (im2col'd) multi-scale conv1d -> LSTM -> FC
# ----------------------------------------------------------------------------
def msnet_kernel(xwin_ref,        # (T, B_TILE, KC_PAD)   time-major im2col windows, batch tile
                 wconv_ref,       # (KC_PAD, CC_PAD)      fused/flattened 5-tap conv weight
                 bconv_ref,       # (1, CC_PAD)
                 wih_ref,         # (CC_PAD, 4*H_PAD)     = W_ih.T, gate-padded
                 blstm_ref,       # (1, 4*H_PAD)          = b_ih + b_hh, gate-padded
                 whh_ref,         # (H_PAD, 4*H_PAD)      = W_hh.T, padded
                 wfc_ref,         # (H_PAD, O_PAD)        = W_fc.T, padded
                 bfc_ref,         # (1, O_PAD)
                 out_ref,         # (T, B_TILE, O_PAD)
                 gx_ref,          # VMEM (T, B_TILE, 4*H_PAD)  precomputed input-side gates
                 h_ref):          # VMEM (T, B_TILE, H_PAD)    hidden states for post-loop FC
    T = out_ref.shape[0]
    BP = out_ref.shape[1]
    HP = H_PAD

    # --- conv stage: one matmul over the im2col'd window (bias + ReLU fused) ---
    conv = jnp.einsum('tbk,kc->tbc', xwin_ref[...], wconv_ref[...],
                      preferred_element_type=jnp.float32)
    conv = jnp.maximum(conv + bconv_ref[...], 0.0)               # (T, BP, CC_PAD)

    # --- input-side LSTM gates for ALL timesteps, hoisted off the recurrence ---
    gx_ref[...] = (jnp.einsum('tbc,cg->tbg', conv, wih_ref[...],
                              preferred_element_type=jnp.float32)
                   + blstm_ref[...])                             # (T, BP, 4*H_PAD)

    whh = whh_ref[...]                                           # (H_PAD, 4*H_PAD)

    # --- recurrence: only h @ W_hh + gate nonlinearities on the serial chain ---
    # PyTorch gate order i, f, g, o; each gate occupies one aligned 128-lane block.
    h = jnp.zeros((BP, HP), jnp.float32)
    c = jnp.zeros((BP, HP), jnp.float32)
    for t in range(T):                                           # fully unrolled (T static/small)
        gates = gx_ref[t] + jnp.dot(h, whh, preferred_element_type=jnp.float32)  # (BP, 4*HP)
        i_g = jax.nn.sigmoid(gates[:, 0 * HP:1 * HP])
        f_g = jax.nn.sigmoid(gates[:, 1 * HP:2 * HP])
        g_g = jnp.tanh(gates[:, 2 * HP:3 * HP])
        o_g = jax.nn.sigmoid(gates[:, 3 * HP:4 * HP])
        c = f_g * c + i_g * g_g
        h = o_g * jnp.tanh(c)
        h_ref[t] = h
    # TODO(synk): for production-length T, switch to lax.fori_loop(..., unroll=8) and T-tile
    # the conv / gx phases to bound VMEM residency.

    # --- output projection for ALL timesteps in one matmul, lane-dense (128-wide) store ---
    out_ref[...] = (jnp.einsum('tbh,ho->tbo', h_ref[...], wfc_ref[...],
                               preferred_element_type=jnp.float32)
                    + bfc_ref[...])


# ----------------------------------------------------------------------------
# Wrapper
# ----------------------------------------------------------------------------
def _wspec(shape):
    n = len(shape)
    return pl.BlockSpec(shape, lambda i, _n=n: (0,) * _n)


@jax.jit
def gesture_recognition_forward(x, kparams):
    """x: (B, T, NUM_INPUT) float32 -> (B, T, NUM_OUTPUT) float32."""
    B, T, C = x.shape
    BPT = ((B + B_TILE - 1) // B_TILE) * B_TILE                  # batch padded to sublane width

    # Layout plumbing only: pad batch + time, build the 5-tap sliding window (im2col),
    # go time-major, and zero-pad the window lanes to 128.  No compute hoisted.
    xb = jnp.pad(x, ((0, BPT - B), (MAX_PAD, MAX_PAD), (0, 0)))  # (BPT, T+2p, C)
    xwin = jnp.concatenate([xb[:, j:j + T, :] for j in range(MAX_K)], axis=-1)  # (BPT, T, 5C)
    xwin = jnp.transpose(xwin, (1, 0, 2))                        # (T, BPT, 5C)
    xwin = jnp.pad(xwin, ((0, 0), (0, 0), (0, KC_PAD - MAX_K * C)))  # (T, BPT, KC_PAD)

    operands = (xwin,) + tuple(kparams)
    in_specs = ([pl.BlockSpec((T, B_TILE, KC_PAD), lambda i: (0, i, 0))]
                + [_wspec(p.shape) for p in kparams])

    out_tbo = pl.pallas_call(
        msnet_kernel,
        out_shape=jax.ShapeDtypeStruct((T, BPT, O_PAD), jnp.float32),
        grid=(BPT // B_TILE,),                                   # batch-tile grid
        in_specs=in_specs,
        out_specs=pl.BlockSpec((T, B_TILE, O_PAD), lambda i: (0, i, 0)),
        scratch_shapes=[pltpu.VMEM((T, B_TILE, 4 * H_PAD), jnp.float32),
                        pltpu.VMEM((T, B_TILE, H_PAD), jnp.float32)],
        compiler_params=pltpu.CompilerParams(
            dimension_semantics=("parallel",)),
    )(*operands)

    # NOTE: dropout in GestureRecognitionModel.forward does not affect the returned tensor.
    out = out_tbo[:, :B, :NUM_OUTPUT]                            # strip batch / class padding
    return jnp.transpose(out, (1, 0, 2))                         # (B, T, NUM_OUTPUT)


# ----------------------------------------------------------------------------
# Parameters
# ----------------------------------------------------------------------------
def init_params(key):
    """Deterministic synthetic MSNet parameters in their 'natural' layout."""
    ks = jax.random.split(key, 10)
    H, Ci, Cb, Cc, O = NUM_HIDDEN, NUM_INPUT, C_BRANCH, C_CONV, NUM_OUTPUT

    def u(k, shape, fan_in):
        lim = 1.0 / jnp.sqrt(jnp.float32(fan_in))
        return jax.random.uniform(k, shape, jnp.float32, -lim, lim)

    w1 = u(ks[0], (1, Ci, Cb), Ci * 1)     # conv branch k=1: (taps, C_in, C_branch)
    w3 = u(ks[1], (3, Ci, Cb), Ci * 3)     # conv branch k=3
    w5 = u(ks[2], (5, Ci, Cb), Ci * 5)     # conv branch k=5
    bconv = u(ks[3], (Cc,), Ci)
    wih = u(ks[4], (Cc, 4 * H), H)         # = W_ih.T, gate order i, f, g, o
    whh = u(ks[5], (H, 4 * H), H)          # = W_hh.T
    blstm = u(ks[6], (4 * H,), H)          # = b_ih + b_hh (fused)
    wfc = u(ks[7], (H, O), H)              # = W_fc.T
    bfc = u(ks[8], (O,), H)
    return (w1, w3, w5, bconv, wih, whh, blstm, wfc, bfc)


def pack_params(params):
    """Host-side repacking for the kernel:
       * fuse the 3 conv branches into one flattened 5-tap (im2col) weight,
       * pad im2col lanes 80 -> 128, conv features 48 -> 128, hidden 48 -> 128 and classes
         9 -> 128 with zero rows/cols so every in-kernel tile is 128-lane aligned.
       Padded lanes stay exactly 0 through conv (zero weight cols + zero bias + ReLU), through
       the LSTM (zero W rows/cols + zero bias -> c_pad, h_pad stay 0) and through the FC
       (zero rows/cols), so they never leak into real lanes."""
    w1, w3, w5, bconv, wih, whh, blstm, wfc, bfc = params
    Ci, Cb, Cc = NUM_INPUT, C_BRANCH, C_CONV
    H, HP, O, OP = NUM_HIDDEN, H_PAD, NUM_OUTPUT, O_PAD

    # Fused 5-tap conv weight (taps, C_in, C_conv), zero-padded taps per branch.
    wconv = jnp.zeros((MAX_K, Ci, Cc), jnp.float32)
    wconv = wconv.at[2:3, :, 0 * Cb:1 * Cb].set(w1)    # k=1 -> center tap only
    wconv = wconv.at[1:4, :, 1 * Cb:2 * Cb].set(w3)    # k=3 -> taps 1..3
    wconv = wconv.at[0:5, :, 2 * Cb:3 * Cb].set(w5)    # k=5 -> taps 0..4
    # Flatten taps into the contraction dim (matches the wrapper's im2col lane order) and pad.
    wconv_p = (jnp.zeros((KC_PAD, CC_PAD), jnp.float32)
               .at[:MAX_K * Ci, :Cc].set(wconv.reshape(MAX_K * Ci, Cc)))
    bconv_p = jnp.zeros((1, CC_PAD), jnp.float32).at[0, :Cc].set(bconv)

    wih_p = jnp.zeros((CC_PAD, 4 * HP), jnp.float32)
    whh_p = jnp.zeros((HP, 4 * HP), jnp.float32)
    blstm_p = jnp.zeros((1, 4 * HP), jnp.float32)
    for g in range(4):                                 # PyTorch gate order i, f, g, o
        wih_p = wih_p.at[:Cc, g * HP:g * HP + H].set(wih[:, g * H:(g + 1) * H])
        whh_p = whh_p.at[:H, g * HP:g * HP + H].set(whh[:, g * H:(g + 1) * H])
        blstm_p = blstm_p.at[0, g * HP:g * HP + H].set(blstm[g * H:(g + 1) * H])

    wfc_p = jnp.zeros((HP, OP), jnp.float32).at[:H, :O].set(wfc)
    bfc_p = jnp.zeros((1, OP), jnp.float32).at[0, :O].set(bfc)
    return (wconv_p, bconv_p, wih_p, blstm_p, whh_p, wfc_p, bfc_p)


if __name__ == "__main__":
    key = jax.random.PRNGKey(0)
    k_x, k_p = jax.random.split(key)

    B, T = 2, 8
    x = jax.random.normal(k_x, (B, T, NUM_INPUT), jnp.float32)
    kparams = pack_params(init_params(k_p))

    out = gesture_recognition_forward(x, kparams)
    out = jax.block_until_ready(out)

    assert out.shape == (B, T, NUM_OUTPUT), out.shape
    assert out.dtype == jnp.float32
    assert bool(jnp.all(jnp.isfinite(out)))
    print("KERNEL_OK")
</pallas_src>

<mosaic_0001>
module attributes {stable_mosaic.version = 11 : i64} {
  func.func @msnet_kernel(%arg0: i32, %arg1: memref<8x8x128xf32, #tpu.memory_space<vmem>>, %arg2: memref<128x128xf32, #tpu.memory_space<vmem>>, %arg3: memref<1x128xf32, #tpu.memory_space<vmem>>, %arg4: memref<128x512xf32, #tpu.memory_space<vmem>>, %arg5: memref<1x512xf32, #tpu.memory_space<vmem>>, %arg6: memref<128x512xf32, #tpu.memory_space<vmem>>, %arg7: memref<128x128xf32, #tpu.memory_space<vmem>>, %arg8: memref<1x128xf32, #tpu.memory_space<vmem>>, %arg9: memref<8x8x128xf32, #tpu.memory_space<vmem>>, %arg10: memref<8x8x512xf32, #tpu.memory_space<vmem>>, %arg11: memref<8x8x128xf32, #tpu.memory_space<vmem>>) attributes {dimension_semantics = [#tpu.dimension_semantics<parallel>], iteration_bounds = array<i64: 1>, scalar_prefetch = 0 : i64, scratch_operands = 2 : i64, tpu.core_type = #tpu.core_type<tc>, window_params = [{transform_indices = @transform_0, window_bounds = array<i64: 8, 8, 128>}, {pipeline_mode = #tpu.pipeline_mode<synchronous>, transform_indices = @transform_1, window_bounds = array<i64: 128, 128>}, {pipeline_mode = #tpu.pipeline_mode<synchronous>, transform_indices = @transform_2, window_bounds = array<i64: 1, 128>}, {pipeline_mode = #tpu.pipeline_mode<synchronous>, transform_indices = @transform_3, window_bounds = array<i64: 128, 512>}, {pipeline_mode = #tpu.pipeline_mode<synchronous>, transform_indices = @transform_4, window_bounds = array<i64: 1, 512>}, {pipeline_mode = #tpu.pipeline_mode<synchronous>, transform_indices = @transform_5, window_bounds = array<i64: 128, 512>}, {pipeline_mode = #tpu.pipeline_mode<synchronous>, transform_indices = @transform_6, window_bounds = array<i64: 128, 128>}, {pipeline_mode = #tpu.pipeline_mode<synchronous>, transform_indices = @transform_7, window_bounds = array<i64: 1, 128>}, {transform_indices = @transform_8, window_bounds = array<i64: 8, 8, 128>}]} {
    %c0 = arith.constant 0 : index
    %c0_0 = arith.constant 0 : index
    %c0_1 = arith.constant 0 : index
    %0 = vector.load %arg1[%c0, %c0_0, %c0_1] : memref<8x8x128xf32, #tpu.memory_space<vmem>>, vector<8x8x128xf32>
    %c0_2 = arith.constant 0 : index
    %c0_3 = arith.constant 0 : index
    %1 = vector.load %arg2[%c0_2, %c0_3] : memref<128x128xf32, #tpu.memory_space<vmem>>, vector<128x128xf32>
    "tpu.trace_start"() <{level = 10 : i32, message = "tbk,kc->tbc"}> : () -> ()
    %cst = arith.constant dense<0.000000e+00> : vector<8x8x128xf32>
    %2 = tpu.matmul %0, %1, %cst {dimension_numbers = #tpu.dot_dimension_numbers<[2], [0], [0, 1], [1], [0, 0, 0, 1, 1, 1], [], []>} : vector<8x8x128xf32>, vector<128x128xf32>, vector<8x8x128xf32> -> vector<8x8x128xf32>
    "tpu.trace_stop"() : () -> ()
    %c0_4 = arith.constant 0 : index
    %c0_5 = arith.constant 0 : index
    %3 = vector.load %arg3[%c0_4, %c0_5] : memref<1x128xf32, #tpu.memory_space<vmem>>, vector<1x128xf32>
    %4 = vector.shape_cast %3 : vector<1x128xf32> to vector<1x1x128xf32>
    %5 = vector.broadcast %4 : vector<1x1x128xf32> to vector<8x8x128xf32>
    %6 = arith.addf %2, %5 : vector<8x8x128xf32>
    %cst_6 = arith.constant 0.000000e+00 : f32
    %7 = vector.broadcast %cst_6 : f32 to vector<8x8x128xf32>
    %8 = arith.maximumf %6, %7 : vector<8x8x128xf32>
    %c0_7 = arith.constant 0 : index
    %c0_8 = arith.constant 0 : index
    %9 = vector.load %arg4[%c0_7, %c0_8] : memref<128x512xf32, #tpu.memory_space<vmem>>, vector<128x512xf32>
    "tpu.trace_start"() <{level = 10 : i32, message = "tbc,cg->tbg"}> : () -> ()
    %cst_9 = arith.constant dense<0.000000e+00> : vector<8x8x512xf32>
    %10 = tpu.matmul %8, %9, %cst_9 {dimension_numbers = #tpu.dot_dimension_numbers<[2], [0], [0, 1], [1], [0, 0, 0, 1, 1, 1], [], []>} : vector<8x8x128xf32>, vector<128x512xf32>, vector<8x8x512xf32> -> vector<8x8x512xf32>
    "tpu.trace_stop"() : () -> ()
    %c0_10 = arith.constant 0 : index
    %c0_11 = arith.constant 0 : index
    %11 = vector.load %arg5[%c0_10, %c0_11] : memref<1x512xf32, #tpu.memory_space<vmem>>, vector<1x512xf32>
    %12 = vector.shape_cast %11 : vector<1x512xf32> to vector<1x1x512xf32>
    %13 = vector.broadcast %12 : vector<1x1x512xf32> to vector<8x8x512xf32>
    %14 = arith.addf %10, %13 : vector<8x8x512xf32>
    %c0_12 = arith.constant 0 : index
    %c0_13 = arith.constant 0 : index
    %c0_14 = arith.constant 0 : index
    %15 = vector.load %arg10[%c0_12, %c0_13, %c0_14] : memref<8x8x512xf32, #tpu.memory_space<vmem>>, vector<8x8x512xf32>
    tpu.vector_store %arg10[%c0_12, %c0_13, %c0_14], %14 {strides = array<i32>} : memref<8x8x512xf32, #tpu.memory_space<vmem>>, vector<8x8x512xf32>,
    %c0_15 = arith.constant 0 : index
    %c0_16 = arith.constant 0 : index
    %16 = vector.load %arg6[%c0_15, %c0_16] : memref<128x512xf32, #tpu.memory_space<vmem>>, vector<128x512xf32>
    %cst_17 = arith.constant 0.000000e+00 : f32
    %17 = vector.broadcast %cst_17 : f32 to vector<8x128xf32>
    %cst_18 = arith.constant 0.000000e+00 : f32
    %18 = vector.broadcast %cst_18 : f32 to vector<8x128xf32>
    %c0_19 = arith.constant 0 : index
    %c0_20 = arith.constant 0 : index
    %c0_21 = arith.constant 0 : index
    %19 = vector.load %arg10[%c0_19, %c0_20, %c0_21] : memref<8x8x512xf32, #tpu.memory_space<vmem>>, vector<1x8x512xf32>
    %20 = vector.shape_cast %19 : vector<1x8x512xf32> to vector<8x512xf32>
    %cst_22 = arith.constant dense<0.000000e+00> : vector<8x512xf32>
    %21 = tpu.matmul %17, %16, %cst_22 {dimension_numbers = #tpu.dot_dimension_numbers<[1], [0], [0], [1], [0, 0, 1, 1], [], []>} : vector<8x128xf32>, vector<128x512xf32>, vector<8x512xf32> -> vector<8x512xf32>
    %22 = arith.addf %20, %21 : vector<8x512xf32>
    %23 = vector.extract_strided_slice %22 {offsets = [0, 0], sizes = [8, 128], strides = [1, 1]} : vector<8x512xf32> to vector<8x128xf32>
    %24 = arith.negf %23 : vector<8x128xf32>
    %25 = math.exp %24 : vector<8x128xf32>
    %cst_23 = arith.constant 1.000000e+00 : f32
    %26 = vector.broadcast %cst_23 : f32 to vector<8x128xf32>
    %27 = arith.addf %26, %25 : vector<8x128xf32>
    %28 = arith.divf %26, %27 : vector<8x128xf32>
    %29 = vector.extract_strided_slice %22 {offsets = [0, 128], sizes = [8, 128], strides = [1, 1]} : vector<8x512xf32> to vector<8x128xf32>
    %30 = arith.negf %29 : vector<8x128xf32>
    %31 = math.exp %30 : vector<8x128xf32>
    %cst_24 = arith.constant 1.000000e+00 : f32
    %32 = vector.broadcast %cst_24 : f32 to vector<8x128xf32>
    %33 = arith.addf %32, %31 : vector<8x128xf32>
    %34 = arith.divf %32, %33 : vector<8x128xf32>
    %35 = vector.extract_strided_slice %22 {offsets = [0, 256], sizes = [8, 128], strides = [1, 1]} : vector<8x512xf32> to vector<8x128xf32>
    %36 = math.tanh %35 : vector<8x128xf32>
    %37 = vector.extract_strided_slice %22 {offsets = [0, 384], sizes = [8, 128], strides = [1, 1]} : vector<8x512xf32> to vector<8x128xf32>
    %38 = arith.negf %37 : vector<8x128xf32>
    %39 = math.exp %38 : vector<8x128xf32>
    %cst_25 = arith.constant 1.000000e+00 : f32
    %40 = vector.broadcast %cst_25 : f32 to vector<8x128xf32>
    %41 = arith.addf %40, %39 : vector<8x128xf32>
    %42 = arith.divf %40, %41 : vector<8x128xf32>
    %43 = arith.mulf %34, %18 : vector<8x128xf32>
    %44 = arith.mulf %28, %36 : vector<8x128xf32>
    %45 = arith.addf %43, %44 : vector<8x128xf32>
    %46 = math.tanh %45 : vector<8x128xf32>
    %47 = arith.mulf %42, %46 : vector<8x128xf32>
    %c0_26 = arith.constant 0 : index
    %c0_27 = arith.constant 0 : index
    %c0_28 = arith.constant 0 : index
    %48 = vector.load %arg11[%c0_26, %c0_27, %c0_28] : memref<8x8x128xf32, #tpu.memory_space<vmem>>, vector<1x8x128xf32>
    %49 = vector.shape_cast %48 : vector<1x8x128xf32> to vector<8x128xf32>
    %50 = vector.shape_cast %47 : vector<8x128xf32> to vector<1x8x128xf32>
    tpu.vector_store %arg11[%c0_26, %c0_27, %c0_28], %50 {strides = array<i32>} : memref<8x8x128xf32, #tpu.memory_space<vmem>>, vector<1x8x128xf32>,
    %c1 = arith.constant 1 : index
    %c0_29 = arith.constant 0 : index
    %c0_30 = arith.constant 0 : index
    %51 = vector.load %arg10[%c1, %c0_29, %c0_30] : memref<8x8x512xf32, #tpu.memory_space<vmem>>, vector<1x8x512xf32>
    %52 = vector.shape_cast %51 : vector<1x8x512xf32> to vector<8x512xf32>
    %cst_31 = arith.constant dense<0.000000e+00> : vector<8x512xf32>
    %53 = tpu.matmul %47, %16, %cst_31 {dimension_numbers = #tpu.dot_dimension_numbers<[1], [0], [0], [1], [0, 0, 1, 1], [], []>} : vector<8x128xf32>, vector<128x512xf32>, vector<8x512xf32> -> vector<8x512xf32>
    %54 = arith.addf %52, %53 : vector<8x512xf32>
    %55 = vector.extract_strided_slice %54 {offsets = [0, 0], sizes = [8, 128], strides = [1, 1]} : vector<8x512xf32> to vector<8x128xf32>
    %56 = arith.negf %55 : vector<8x128xf32>
    %57 = math.exp %56 : vector<8x128xf32>
    %cst_32 = arith.constant 1.000000e+00 : f32
    %58 = vector.broadcast %cst_32 : f32 to vector<8x128xf32>
    %59 = arith.addf %58, %57 : vector<8x128xf32>
    %60 = arith.divf %58, %59 : vector<8x128xf32>
    %61 = vector.extract_strided_slice %54 {offsets = [0, 128], sizes = [8, 128], strides = [1, 1]} : vector<8x512xf32> to vector<8x128xf32>
    %62 = arith.negf %61 : vector<8x128xf32>
    %63 = math.exp %62 : vector<8x128xf32>
    %cst_33 = arith.constant 1.000000e+00 : f32
    %64 = vector.broadcast %cst_33 : f32 to vector<8x128xf32>
    %65 = arith.addf %64, %63 : vector<8x128xf32>
    %66 = arith.divf %64, %65 : vector<8x128xf32>
    %67 = vector.extract_strided_slice %54 {offsets = [0, 256], sizes = [8, 128], strides = [1, 1]} : vector<8x512xf32> to vector<8x128xf32>
    %68 = math.tanh %67 : vector<8x128xf32>
    %69 = vector.extract_strided_slice %54 {offsets = [0, 384], sizes = [8, 128], strides = [1, 1]} : vector<8x512xf32> to vector<8x128xf32>
    %70 = arith.negf %69 : vector<8x128xf32>
    %71 = math.exp %70 : vector<8x128xf32>
    %cst_34 = arith.constant 1.000000e+00 : f32
    %72 = vector.broadcast %cst_34 : f32 to vector<8x128xf32>
    %73 = arith.addf %72, %71 : vector<8x128xf32>
    %74 = arith.divf %72, %73 : vector<8x128xf32>
    %75 = arith.mulf %66, %45 : vector<8x128xf32>
    %76 = arith.mulf %60, %68 : vector<8x128xf32>
    %77 = arith.addf %75, %76 : vector<8x128xf32>
    %78 = math.tanh %77 : vector<8x128xf32>
    %79 = arith.mulf %74, %78 : vector<8x128xf32>
    %c1_35 = arith.constant 1 : index
    %c0_36 = arith.constant 0 : index
    %c0_37 = arith.constant 0 : index
    %80 = vector.load %arg11[%c1_35, %c0_36, %c0_37] : memref<8x8x128xf32, #tpu.memory_space<vmem>>, vector<1x8x128xf32>
    %81 = vector.shape_cast %80 : vector<1x8x128xf32> to vector<8x128xf32>
    %82 = vector.shape_cast %79 : vector<8x128xf32> to vector<1x8x128xf32>
    tpu.vector_store %arg11[%c1_35, %c0_36, %c0_37], %82 {strides = array<i32>} : memref<8x8x128xf32, #tpu.memory_space<vmem>>, vector<1x8x128xf32>,
    %c2 = arith.constant 2 : index
    %c0_38 = arith.constant 0 : index
    %c0_39 = arith.constant 0 : index
    %83 = vector.load %arg10[%c2, %c0_38, %c0_39] : memref<8x8x512xf32, #tpu.memory_space<vmem>>, vector<1x8x512xf32>
    %84 = vector.shape_cast %83 : vector<1x8x512xf32> to vector<8x512xf32>
    %cst_40 = arith.constant dense<0.000000e+00> : vector<8x512xf32>
    %85 = tpu.matmul %79, %16, %cst_40 {dimension_numbers = #tpu.dot_dimension_numbers<[1], [0], [0], [1], [0, 0, 1, 1], [], []>} : vector<8x128xf32>, vector<128x512xf32>, vector<8x512xf32> -> vector<8x512xf32>
    %86 = arith.addf %84, %85 : vector<8x512xf32>
    %87 = vector.extract_strided_slice %86 {offsets = [0, 0], sizes = [8, 128], strides = [1, 1]} : vector<8x512xf32> to vector<8x128xf32>
    %88 = arith.negf %87 : vector<8x128xf32>
    %89 = math.exp %88 : vector<8x128xf32>
    %cst_41 = arith.constant 1.000000e+00 : f32
    %90 = vector.broadcast %cst_41 : f32 to vector<8x128xf32>
    %91 = arith.addf %90, %89 : vector<8x128xf32>
    %92 = arith.divf %90, %91 : vector<8x128xf32>
    %93 = vector.extract_strided_slice %86 {offsets = [0, 128], sizes = [8, 128], strides = [1, 1]} : vector<8x512xf32> to vector<8x128xf32>
    %94 = arith.negf %93 : vector<8x128xf32>
    %95 = math.exp %94 : vector<8x128xf32>
    %cst_42 = arith.constant 1.000000e+00 : f32
    %96 = vector.broadcast %cst_42 : f32 to vector<8x128xf32>
    %97 = arith.addf %96, %95 : vector<8x128xf32>
    %98 = arith.divf %96, %97 : vector<8x128xf32>
    %99 = vector.extract_strided_slice %86 {offsets = [0, 256], sizes = [8, 128], strides = [1, 1]} : vector<8x512xf32> to vector<8x128xf32>
    %100 = math.tanh %99 : vector<8x128xf32>
    %101 = vector.extract_strided_slice %86 {offsets = [0, 384], sizes = [8, 128], strides = [1, 1]} : vector<8x512xf32> to vector<8x128xf32>
    %102 = arith.negf %101 : vector<8x128xf32>
    %103 = math.exp %102 : vector<8x128xf32>
    %cst_43 = arith.constant 1.000000e+00 : f32
    %104 = vector.broadcast %cst_43 : f32 to vector<8x128xf32>
    %105 = arith.addf %104, %103 : vector<8x128xf32>
    %106 = arith.divf %104, %105 : vector<8x128xf32>
    %107 = arith.mulf %98, %77 : vector<8x128xf32>
    %108 = arith.mulf %92, %100 : vector<8x128xf32>
    %109 = arith.addf %107, %108 : vector<8x128xf32>
    %110 = math.tanh %109 : vector<8x128xf32>
    %111 = arith.mulf %106, %110 : vector<8x128xf32>
    %c2_44 = arith.constant 2 : index
    %c0_45 = arith.constant 0 : index
    %c0_46 = arith.constant 0 : index
    %112 = vector.load %arg11[%c2_44, %c0_45, %c0_46] : memref<8x8x128xf32, #tpu.memory_space<vmem>>, vector<1x8x128xf32>
    %113 = vector.shape_cast %112 : vector<1x8x128xf32> to vector<8x128xf32>
    %114 = vector.shape_cast %111 : vector<8x128xf32> to vector<1x8x128xf32>
    tpu.vector_store %arg11[%c2_44, %c0_45, %c0_46], %114 {strides = array<i32>} : memref<8x8x128xf32, #tpu.memory_space<vmem>>, vector<1x8x128xf32>,
    %c3 = arith.constant 3 : index
    %c0_47 = arith.constant 0 : index
    %c0_48 = arith.constant 0 : index
    %115 = vector.load %arg10[%c3, %c0_47, %c0_48] : memref<8x8x512xf32, #tpu.memory_space<vmem>>, vector<1x8x512xf32>
    %116 = vector.shape_cast %115 : vector<1x8x512xf32> to vector<8x512xf32>
    %cst_49 = arith.constant dense<0.000000e+00> : vector<8x512xf32>
    %117 = tpu.matmul %111, %16, %cst_49 {dimension_numbers = #tpu.dot_dimension_numbers<[1], [0], [0], [1], [0, 0, 1, 1], [], []>} : vector<8x128xf32>, vector<128x512xf32>, vector<8x512xf32> -> vector<8x512xf32>
    %118 = arith.addf %116, %117 : vector<8x512xf32>
    %119 = vector.extract_strided_slice %118 {offsets = [0, 0], sizes = [8, 128], strides = [1, 1]} : vector<8x512xf32> to vector<8x128xf32>
    %120 = arith.negf %119 : vector<8x128xf32>
    %121 = math.exp %120 : vector<8x128xf32>
    %cst_50 = arith.constant 1.000000e+00 : f32
    %122 = vector.broadcast %cst_50 : f32 to vector<8x128xf32>
    %123 = arith.addf %122, %121 : vector<8x128xf32>
    %124 = arith.divf %122, %123 : vector<8x128xf32>
    %125 = vector.extract_strided_slice %118 {offsets = [0, 128], sizes = [8, 128], strides = [1, 1]} : vector<8x512xf32> to vector<8x128xf32>
    %126 = arith.negf %125 : vector<8x128xf32>
    %127 = math.exp %126 : vector<8x128xf32>
    %cst_51 = arith.constant 1.000000e+00 : f32
    %128 = vector.broadcast %cst_51 : f32 to vector<8x128xf32>
    %129 = arith.addf %128, %127 : vector<8x128xf32>
    %130 = arith.divf %128, %129 : vector<8x128xf32>
    %131 = vector.extract_strided_slice %118 {offsets = [0, 256], sizes = [8, 128], strides = [1, 1]} : vector<8x512xf32> to vector<8x128xf32>
    %132 = math.tanh %131 : vector<8x128xf32>
    %133 = vector.extract_strided_slice %118 {offsets = [0, 384], sizes = [8, 128], strides = [1, 1]} : vector<8x512xf32> to vector<8x128xf32>
    %134 = arith.negf %133 : vector<8x128xf32>
    %135 = math.exp %134 : vector<8x128xf32>
    %cst_52 = arith.constant 1.000000e+00 : f32
    %136 = vector.broadcast %cst_52 : f32 to vector<8x128xf32>
    %137 = arith.addf %136, %135 : vector<8x128xf32>
    %138 = arith.divf %136, %137 : vector<8x128xf32>
    %139 = arith.mulf %130, %109 : vector<8x128xf32>
    %140 = arith.mulf %124, %132 : vector<8x128xf32>
    %141 = arith.addf %139, %140 : vector<8x128xf32>
    %142 = math.tanh %141 : vector<8x128xf32>
    %143 = arith.mulf %138, %142 : vector<8x128xf32>
    %c3_53 = arith.constant 3 : index
    %c0_54 = arith.constant 0 : index
    %c0_55 = arith.constant 0 : index
    %144 = vector.load %arg11[%c3_53, %c0_54, %c0_55] : memref<8x8x128xf32, #tpu.memory_space<vmem>>, vector<1x8x128xf32>
    %145 = vector.shape_cast %144 : vector<1x8x128xf32> to vector<8x128xf32>
    %146 = vector.shape_cast %143 : vector<8x128xf32> to vector<1x8x128xf32>
    tpu.vector_store %arg11[%c3_53, %c0_54, %c0_55], %146 {strides = array<i32>} : memref<8x8x128xf32, #tpu.memory_space<vmem>>, vector<1x8x128xf32>,
    %c4 = arith.constant 4 : index
    %c0_56 = arith.constant 0 : index
    %c0_57 = arith.constant 0 : index
    %147 = vector.load %arg10[%c4, %c0_56, %c0_57] : memref<8x8x512xf32, #tpu.memory_space<vmem>>, vector<1x8x512xf32>
    %148 = vector.shape_cast %147 : vector<1x8x512xf32> to vector<8x512xf32>
    %cst_58 = arith.constant dense<0.000000e+00> : vector<8x512xf32>
    %149 = tpu.matmul %143, %16, %cst_58 {dimension_numbers = #tpu.dot_dimension_numbers<[1], [0], [0], [1], [0, 0, 1, 1], [], []>} : vector<8x128xf32>, vector<128x512xf32>, vector<8x512xf32> -> vector<8x512xf32>
    %150 = arith.addf %148, %149 : vector<8x512xf32>
    %151 = vector.extract_strided_slice %150 {offsets = [0, 0], sizes = [8, 128], strides = [1, 1]} : vector<8x512xf32> to vector<8x128xf32>
    %152 = arith.negf %151 : vector<8x128xf32>
    %153 = math.exp %152 : vector<8x128xf32>
    %cst_59 = arith.constant 1.000000e+00 : f32
    %154 = vector.broadcast %cst_59 : f32 to vector<8x128xf32>
    %155 = arith.addf %154, %153 : vector<8x128xf32>
    %156 = arith.divf %154, %155 : vector<8x128xf32>
    %157 = vector.extract_strided_slice %150 {offsets = [0, 128], sizes = [8, 128], strides = [1, 1]} : vector<8x512xf32> to vector<8x128xf32>
    %158 = arith.negf %157 : vector<8x128xf32>
    %159 = math.exp %158 : vector<8x128xf32>
    %cst_60 = arith.constant 1.000000e+00 : f32
    %160 = vector.broadcast %cst_60 : f32 to vector<8x128xf32>
    %161 = arith.addf %160, %159 : vector<8x128xf32>
    %162 = arith.divf %160, %161 : vector<8x128xf32>
    %163 = vector.extract_strided_slice %150 {offsets = [0, 256], sizes = [8, 128], strides = [1, 1]} : vector<8x512xf32> to vector<8x128xf32>
    %164 = math.tanh %163 : vector<8x128xf32>
    %165 = vector.extract_strided_slice %150 {offsets = [0, 384], sizes = [8, 128], strides = [1, 1]} : vector<8x512xf32> to vector<8x128xf32>
    %166 = arith.negf %165 : vector<8x128xf32>
    %167 = math.exp %166 : vector<8x128xf32>
    %cst_61 = arith.constant 1.000000e+00 : f32
    %168 = vector.broadcast %cst_61 : f32 to vector<8x128xf32>
    %169 = arith.addf %168, %167 : vector<8x128xf32>
    %170 = arith.divf %168, %169 : vector<8x128xf32>
    %171 = arith.mulf %162, %141 : vector<8x128xf32>
    %172 = arith.mulf %156, %164 : vector<8x128xf32>
    %173 = arith.addf %171, %172 : vector<8x128xf32>
    %174 = math.tanh %173 : vector<8x128xf32>
    %175 = arith.mulf %170, %174 : vector<8x128xf32>
    %c4_62 = arith.constant 4 : index
    %c0_63 = arith.constant 0 : index
    %c0_64 = arith.constant 0 : index
    %176 = vector.load %arg11[%c4_62, %c0_63, %c0_64] : memref<8x8x128xf32, #tpu.memory_space<vmem>>, vector<1x8x128xf32>
    %177 = vector.shape_cast %176 : vector<1x8x128xf32> to vector<8x128xf32>
    %178 = vector.shape_cast %175 : vector<8x128xf32> to vector<1x8x128xf32>
    tpu.vector_store %arg11[%c4_62, %c0_63, %c0_64], %178 {strides = array<i32>} : memref<8x8x128xf32, #tpu.memory_space<vmem>>, vector<1x8x128xf32>,
    %c5 = arith.constant 5 : index
    %c0_65 = arith.constant 0 : index
    %c0_66 = arith.constant 0 : index
    %179 = vector.load %arg10[%c5, %c0_65, %c0_66] : memref<8x8x512xf32, #tpu.memory_space<vmem>>, vector<1x8x512xf32>
    %180 = vector.shape_cast %179 : vector<1x8x512xf32> to vector<8x512xf32>
    %cst_67 = arith.constant dense<0.000000e+00> : vector<8x512xf32>
    %181 = tpu.matmul %175, %16, %cst_67 {dimension_numbers = #tpu.dot_dimension_numbers<[1], [0], [0], [1], [0, 0, 1, 1], [], []>} : vector<8x128xf32>, vector<128x512xf32>, vector<8x512xf32> -> vector<8x512xf32>
    %182 = arith.addf %180, %181 : vector<8x512xf32>
    %183 = vector.extract_strided_slice %182 {offsets = [0, 0], sizes = [8, 128], strides = [1, 1]} : vector<8x512xf32> to vector<8x128xf32>
    %184 = arith.negf %183 : vector<8x128xf32>
    %185 = math.exp %184 : vector<8x128xf32>
    %cst_68 = arith.constant 1.000000e+00 : f32
    %186 = vector.broadcast %cst_68 : f32 to vector<8x128xf32>
    %187 = arith.addf %186, %185 : vector<8x128xf32>
    %188 = arith.divf %186, %187 : vector<8x128xf32>
    %189 = vector.extract_strided_slice %182 {offsets = [0, 128], sizes = [8, 128], strides = [1, 1]} : vector<8x512xf32> to vector<8x128xf32>
    %190 = arith.negf %189 : vector<8x128xf32>
    %191 = math.exp %190 : vector<8x128xf32>
    %cst_69 = arith.constant 1.000000e+00 : f32
    %192 = vector.broadcast %cst_69 : f32 to vector<8x128xf32>
    %193 = arith.addf %192, %191 : vector<8x128xf32>
    %194 = arith.divf %192, %193 : vector<8x128xf32>
    %195 = vector.extract_strided_slice %182 {offsets = [0, 256], sizes = [8, 128], strides = [1, 1]} : vector<8x512xf32> to vector<8x128xf32>
    %196 = math.tanh %195 : vector<8x128xf32>
    %197 = vector.extract_strided_slice %182 {offsets = [0, 384], sizes = [8, 128], strides = [1, 1]} : vector<8x512xf32> to vector<8x128xf32>
    %198 = arith.negf %197 : vector<8x128xf32>
    %199 = math.exp %198 : vector<8x128xf32>
    %cst_70 = arith.constant 1.000000e+00 : f32
    %200 = vector.broadcast %cst_70 : f32 to vector<8x128xf32>
    %201 = arith.addf %200, %199 : vector<8x128xf32>
    %202 = arith.divf %200, %201 : vector<8x128xf32>
    %203 = arith.mulf %194, %173 : vector<8x128xf32>
    %204 = arith.mulf %188, %196 : vector<8x128xf32>
    %205 = arith.addf %203, %204 : vector<8x128xf32>
    %206 = math.tanh %205 : vector<8x128xf32>
    %207 = arith.mulf %202, %206 : vector<8x128xf32>
    %c5_71 = arith.constant 5 : index
    %c0_72 = arith.constant 0 : index
    %c0_73 = arith.constant 0 : index
    %208 = vector.load %arg11[%c5_71, %c0_72, %c0_73] : memref<8x8x128xf32, #tpu.memory_space<vmem>>, vector<1x8x128xf32>
    %209 = vector.shape_cast %208 : vector<1x8x128xf32> to vector<8x128xf32>
    %210 = vector.shape_cast %207 : vector<8x128xf32> to vector<1x8x128xf32>
    tpu.vector_store %arg11[%c5_71, %c0_72, %c0_73], %210 {strides = array<i32>} : memref<8x8x128xf32, #tpu.memory_space<vmem>>, vector<1x8x128xf32>,
    %c6 = arith.constant 6 : index
    %c0_74 = arith.constant 0 : index
    %c0_75 = arith.constant 0 : index
    %211 = vector.load %arg10[%c6, %c0_74, %c0_75] : memref<8x8x512xf32, #tpu.memory_space<vmem>>, vector<1x8x512xf32>
    %212 = vector.shape_cast %211 : vector<1x8x512xf32> to vector<8x512xf32>
    %cst_76 = arith.constant dense<0.000000e+00> : vector<8x512xf32>
    %213 = tpu.matmul %207, %16, %cst_76 {dimension_numbers = #tpu.dot_dimension_numbers<[1], [0], [0], [1], [0, 0, 1, 1], [], []>} : vector<8x128xf32>, vector<128x512xf32>, vector<8x512xf32> -> vector<8x512xf32>
    %214 = arith.addf %212, %213 : vector<8x512xf32>
    %215 = vector.extract_strided_slice %214 {offsets = [0, 0], sizes = [8, 128], strides = [1, 1]} : vector<8x512xf32> to vector<8x128xf32>
    %216 = arith.negf %215 : vector<8x128xf32>
    %217 = math.exp %216 : vector<8x128xf32>
    %cst_77 = arith.constant 1.000000e+00 : f32
    %218 = vector.broadcast %cst_77 : f32 to vector<8x128xf32>
    %219 = arith.addf %218, %217 : vector<8x128xf32>
    %220 = arith.divf %218, %219 : vector<8x128xf32>
    %221 = vector.extract_strided_slice %214 {offsets = [0, 128], sizes = [8, 128], strides = [1, 1]} : vector<8x512xf32> to vector<8x128xf32>
    %222 = arith.negf %221 : vector<8x128xf32>
    %223 = math.exp %222 : vector<8x128xf32>
    %cst_78 = arith.constant 1.000000e+00 : f32
    %224 = vector.broadcast %cst_78 : f32 to vector<8x128xf32>
    %225 = arith.addf %224, %223 : vector<8x128xf32>
    %226 = arith.divf %224, %225 : vector<8x128xf32>
    %227 = vector.extract_strided_slice %214 {offsets = [0, 256], sizes = [8, 128], strides = [1, 1]} : vector<8x512xf32> to vector<8x128xf32>
    %228 = math.tanh %227 : vector<8x128xf32>
    %229 = vector.extract_strided_slice %214 {offsets = [0, 384], sizes = [8, 128], strides = [1, 1]} : vector<8x512xf32> to vector<8x128xf32>
    %230 = arith.negf %229 : vector<8x128xf32>
    %231 = math.exp %230 : vector<8x128xf32>
    %cst_79 = arith.constant 1.000000e+00 : f32
    %232 = vector.broadcast %cst_79 : f32 to vector<8x128xf32>
    %233 = arith.addf %232, %231 : vector<8x128xf32>
    %234 = arith.divf %232, %233 : vector<8x128xf32>
    %235 = arith.mulf %226, %205 : vector<8x128xf32>
    %236 = arith.mulf %220, %228 : vector<8x128xf32>
    %237 = arith.addf %235, %236 : vector<8x128xf32>
    %238 = math.tanh %237 : vector<8x128xf32>
    %239 = arith.mulf %234, %238 : vector<8x128xf32>
    %c6_80 = arith.constant 6 : index
    %c0_81 = arith.constant 0 : index
    %c0_82 = arith.constant 0 : index
    %240 = vector.load %arg11[%c6_80, %c0_81, %c0_82] : memref<8x8x128xf32, #tpu.memory_space<vmem>>, vector<1x8x128xf32>
    %241 = vector.shape_cast %240 : vector<1x8x128xf32> to vector<8x128xf32>
    %242 = vector.shape_cast %239 : vector<8x128xf32> to vector<1x8x128xf32>
    tpu.vector_store %arg11[%c6_80, %c0_81, %c0_82], %242 {strides = array<i32>} : memref<8x8x128xf32, #tpu.memory_space<vmem>>, vector<1x8x128xf32>,
    %c7 = arith.constant 7 : index
    %c0_83 = arith.constant 0 : index
    %c0_84 = arith.constant 0 : index
    %243 = vector.load %arg10[%c7, %c0_83, %c0_84] : memref<8x8x512xf32, #tpu.memory_space<vmem>>, vector<1x8x512xf32>
    %244 = vector.shape_cast %243 : vector<1x8x512xf32> to vector<8x512xf32>
    %cst_85 = arith.constant dense<0.000000e+00> : vector<8x512xf32>
    %245 = tpu.matmul %239, %16, %cst_85 {dimension_numbers = #tpu.dot_dimension_numbers<[1], [0], [0], [1], [0, 0, 1, 1], [], []>} : vector<8x128xf32>, vector<128x512xf32>, vector<8x512xf32> -> vector<8x512xf32>
    %246 = arith.addf %244, %245 : vector<8x512xf32>
    %247 = vector.extract_strided_slice %246 {offsets = [0, 0], sizes = [8, 128], strides = [1, 1]} : vector<8x512xf32> to vector<8x128xf32>
    %248 = arith.negf %247 : vector<8x128xf32>
    %249 = math.exp %248 : vector<8x128xf32>
    %cst_86 = arith.constant 1.000000e+00 : f32
    %250 = vector.broadcast %cst_86 : f32 to vector<8x128xf32>
    %251 = arith.addf %250, %249 : vector<8x128xf32>
    %252 = arith.divf %250, %251 : vector<8x128xf32>
    %253 = vector.extract_strided_slice %246 {offsets = [0, 128], sizes = [8, 128], strides = [1, 1]} : vector<8x512xf32> to vector<8x128xf32>
    %254 = arith.negf %253 : vector<8x128xf32>
    %255 = math.exp %254 : vector<8x128xf32>
    %cst_87 = arith.constant 1.000000e+00 : f32
    %256 = vector.broadcast %cst_87 : f32 to vector<8x128xf32>
    %257 = arith.addf %256, %255 : vector<8x128xf32>
    %258 = arith.divf %256, %257 : vector<8x128xf32>
    %259 = vector.extract_strided_slice %246 {offsets = [0, 256], sizes = [8, 128], strides = [1, 1]} : vector<8x512xf32> to vector<8x128xf32>
    %260 = math.tanh %259 : vector<8x128xf32>
    %261 = vector.extract_strided_slice %246 {offsets = [0, 384], sizes = [8, 128], strides = [1, 1]} : vector<8x512xf32> to vector<8x128xf32>
    %262 = arith.negf %261 : vector<8x128xf32>
    %263 = math.exp %262 : vector<8x128xf32>
    %cst_88 = arith.constant 1.000000e+00 : f32
    %264 = vector.broadcast %cst_88 : f32 to vector<8x128xf32>
    %265 = arith.addf %264, %263 : vector<8x128xf32>
    %266 = arith.divf %264, %265 : vector<8x128xf32>
    %267 = arith.mulf %258, %237 : vector<8x128xf32>
    %268 = arith.mulf %252, %260 : vector<8x128xf32>
    %269 = arith.addf %267, %268 : vector<8x128xf32>
    %270 = math.tanh %269 : vector<8x128xf32>
    %271 = arith.mulf %266, %270 : vector<8x128xf32>
    %c7_89 = arith.constant 7 : index
    %c0_90 = arith.constant 0 : index
    %c0_91 = arith.constant 0 : index
    %272 = vector.load %arg11[%c7_89, %c0_90, %c0_91] : memref<8x8x128xf32, #tpu.memory_space<vmem>>, vector<1x8x128xf32>
    %273 = vector.shape_cast %272 : vector<1x8x128xf32> to vector<8x128xf32>
    %274 = vector.shape_cast %271 : vector<8x128xf32> to vector<1x8x128xf32>
    tpu.vector_store %arg11[%c7_89, %c0_90, %c0_91], %274 {strides = array<i32>} : memref<8x8x128xf32, #tpu.memory_space<vmem>>, vector<1x8x128xf32>,
    %c0_92 = arith.constant 0 : index
    %c0_93 = arith.constant 0 : index
    %c0_94 = arith.constant 0 : index
    %275 = vector.load %arg11[%c0_92, %c0_93, %c0_94] : memref<8x8x128xf32, #tpu.memory_space<vmem>>, vector<8x8x128xf32>
    %c0_95 = arith.constant 0 : index
    %c0_96 = arith.constant 0 : index
    %276 = vector.load %arg7[%c0_95, %c0_96] : memref<128x128xf32, #tpu.memory_space<vmem>>, vector<128x128xf32>
    "tpu.trace_start"() <{level = 10 : i32, message = "tbh,ho->tbo"}> : () -> ()
    %cst_97 = arith.constant dense<0.000000e+00> : vector<8x8x128xf32>
    %277 = tpu.matmul %275, %276, %cst_97 {dimension_numbers = #tpu.dot_dimension_numbers<[2], [0], [0, 1], [1], [0, 0, 0, 1, 1, 1], [], []>} : vector<8x8x128xf32>, vector<128x128xf32>, vector<8x8x128xf32> -> vector<8x8x128xf32>
    "tpu.trace_stop"() : () -> ()
    %c0_98 = arith.constant 0 : index
    %c0_99 = arith.constant 0 : index
    %278 = vector.load %arg8[%c0_98, %c0_99] : memref<1x128xf32, #tpu.memory_space<vmem>>, vector<1x128xf32>
    %279 = vector.shape_cast %278 : vector<1x128xf32> to vector<1x1x128xf32>
    %280 = vector.broadcast %279 : vector<1x1x128xf32> to vector<8x8x128xf32>
    %281 = arith.addf %277, %280 : vector<8x8x128xf32>
    %c0_100 = arith.constant 0 : index
    %c0_101 = arith.constant 0 : index
    %c0_102 = arith.constant 0 : index
    %282 = vector.load %arg9[%c0_100, %c0_101, %c0_102] : memref<8x8x128xf32, #tpu.memory_space<vmem>>, vector<8x8x128xf32>
    tpu.vector_store %arg9[%c0_100, %c0_101, %c0_102], %281 {strides = array<i32>} : memref<8x8x128xf32, #tpu.memory_space<vmem>>, vector<8x8x128xf32>,
    return
  }
  func.func @transform_0(%arg0: i32) -> (i32, i32, i32) {
    %c0_i32 = arith.constant 0 : i32
    %c0_i32_0 = arith.constant 0 : i32
    %c0_i32_1 = arith.constant 0 : i32
    return %c0_i32, %arg0, %c0_i32_0 : i32, i32, i32
  }
  func.func @transform_1(%arg0: i32) -> (i32, i32) {
    %c0_i32 = arith.constant 0 : i32
    %c0_i32_0 = arith.constant 0 : i32
    %c0_i32_1 = arith.constant 0 : i32
    return %c0_i32, %c0_i32_0 : i32, i32
  }
  func.func @transform_2(%arg0: i32) -> (i32, i32) {
    %c0_i32 = arith.constant 0 : i32
    %c0_i32_0 = arith.constant 0 : i32
    %c0_i32_1 = arith.constant 0 : i32
    return %c0_i32, %c0_i32_0 : i32, i32
  }
  func.func @transform_3(%arg0: i32) -> (i32, i32) {
    %c0_i32 = arith.constant 0 : i32
    %c0_i32_0 = arith.constant 0 : i32
    %c0_i32_1 = arith.constant 0 : i32
    return %c0_i32, %c0_i32_0 : i32, i32
  }
  func.func @transform_4(%arg0: i32) -> (i32, i32) {
    %c0_i32 = arith.constant 0 : i32
    %c0_i32_0 = arith.constant 0 : i32
    %c0_i32_1 = arith.constant 0 : i32
    return %c0_i32, %c0_i32_0 : i32, i32
  }
  func.func @transform_5(%arg0: i32) -> (i32, i32) {
    %c0_i32 = arith.constant 0 : i32
    %c0_i32_0 = arith.constant 0 : i32
    %c0_i32_1 = arith.constant 0 : i32
    return %c0_i32, %c0_i32_0 : i32, i32
  }
  func.func @transform_6(%arg0: i32) -> (i32, i32) {
    %c0_i32 = arith.constant 0 : i32
    %c0_i32_0 = arith.constant 0 : i32
    %c0_i32_1 = arith.constant 0 : i32
    return %c0_i32, %c0_i32_0 : i32, i32
  }
  func.func @transform_7(%arg0: i32) -> (i32, i32) {
    %c0_i32 = arith.constant 0 : i32
    %c0_i32_0 = arith.constant 0 : i32
    %c0_i32_1 = arith.constant 0 : i32
    return %c0_i32, %c0_i32_0 : i32, i32
  }
  func.func @transform_8(%arg0: i32) -> (i32, i32, i32) {
    %c0_i32 = arith.constant 0 : i32
    %c0_i32_0 = arith.constant 0 : i32
    %c0_i32_1 = arith.constant 0 : i32
    return %c0_i32, %arg0, %c0_i32_0 : i32, i32, i32
  }
}

</mosaic_0001>

<llo_original>
// kernel: gesture_recognition_forward.1
$region0: #{gesture_recognition_forward.1}
  #allocation0 [shape = 'u32[]', space=smem, size = 0x4, offset = 0x4, fixed_abs, tag = 'smem constant byte address 0x4 - core index']
  #allocation1 [shape = 'u32[144,128]{1,0:T(1,128)}', space=vmem, size = 0x12000, scoped, tag = 'internal scratch']
  #allocation2 [shape = 'f32[8,8,512]{2,1,0:T(8,128)}', space=vmem, size = 0x20000, scoped, tag = 'scratch operand']
  #allocation3 [shape = 'f32[8,8,128]{2,1,0:T(8,128)}', space=vmem, size = 0x8000, scoped, tag = 'scratch operand']
  %s0 = inlined_call_operand.vmem [shape: f32[8,8,128], index: 0, kind: input, shape index: {}]
  %s1 = inlined_call_operand.vmem [shape: f32[128,128], index: 1, kind: input, shape index: {}]
  %s2 = inlined_call_operand.vmem [shape: f32[1,128], index: 2, kind: input, shape index: {}]
  %s3 = inlined_call_operand.vmem [shape: f32[128,512], index: 3, kind: input, shape index: {}]
  %s4 = inlined_call_operand.vmem [shape: f32[1,512], index: 4, kind: input, shape index: {}]
  %s5 = inlined_call_operand.hbm [shape: f32[128,512], index: 5, kind: input, shape index: {}]
  %s6 = inlined_call_operand.vmem [shape: f32[128,128], index: 6, kind: input, shape index: {}]
  %s7 = inlined_call_operand.vmem [shape: f32[1,128], index: 7, kind: input, shape index: {}]
  %s8 = inlined_call_operand.vmem [shape: f32[8,8,128], index: 8, kind: output, shape index: {}]
  %s9 = sld [smem:[#allocation0]]
  $region46: #{gesture_recognition_forward.1} parent=0
    _
  %s11 = ssub.s32 1, %s9
  %s12 = scalar_select 0, %s11, %s9
  $region1: #{gesture_recognition_forward.1} parent=0
    #allocation4 [shape = 'u8[262144]{0}', space=vmem, size = 0x40000, scoped, tag = 'input window, operand 5, single buffered']
    #allocation5 [shape = 's32[1]{0}', space=sflag, size = 0x4, scoped, tag = 'scoped memory for gesture_recognition_forward.1']
    %13 = vsyncpa [#allocation5], 0
    // Predicated region
    $region2: #{gesture_recognition_forward.1} parent=1 // pred_check
      _
    $region3: #{gesture_recognition_forward.1} parent=1 // pred_check_branch
      %15 = sbr.rel (0) target = $region5
    $region4: #{gesture_recognition_forward.1} parent=1 // pred_region
      _
    $region5: #{gesture_recognition_forward.1} parent=1 // pred_fallthru
      _
    // Predicated region
    $region6: #{gesture_recognition_forward.1} parent=1 // pred_check
      _
    $region7: #{gesture_recognition_forward.1} parent=1 // pred_check_branch
      %17 = sbr.rel (0) target = $region9
    $region8: #{gesture_recognition_forward.1} parent=1 // pred_region
      _
    $region9: #{gesture_recognition_forward.1} parent=1 // pred_fallthru
      _
    // Predicated region
    $region10: #{gesture_recognition_forward.1} parent=1 // pred_check
      _
    $region11: #{gesture_recognition_forward.1} parent=1 // pred_check_branch
      %19 = sbr.rel (0) target = $region13
    $region12: #{gesture_recognition_forward.1} parent=1 // pred_region
      _
    $region13: #{gesture_recognition_forward.1} parent=1 // pred_fallthru
      _
    // Predicated region
    $region14: #{gesture_recognition_forward.1} parent=1 // pred_check
      _
    $region15: #{gesture_recognition_forward.1} parent=1 // pred_check_branch
      %21 = sbr.rel (0) target = $region17
    $region16: #{gesture_recognition_forward.1} parent=1 // pred_region
      _
    $region17: #{gesture_recognition_forward.1} parent=1 // pred_fallthru
      _
    // Predicated region
    $region18: #{gesture_recognition_forward.1} parent=1 // pred_check
      _
    $region19: #{gesture_recognition_forward.1} parent=1 // pred_check_branch
      %23 = sbr.rel (0) target = $region21
    $region20: #{gesture_recognition_forward.1} parent=1 // pred_region
      _
    $region21: #{gesture_recognition_forward.1} parent=1 // pred_fallthru
      _
    // Predicated region
    $region22: #{gesture_recognition_forward.1} parent=1 // pred_check
      _
    $region23: #{gesture_recognition_forward.1} parent=1 // pred_check_branch
      %25 = sbr.rel (0) target = $region25
    $region24: #{gesture_recognition_forward.1} parent=1 // pred_region
      %s27 = ssub.s32 8192, 8192
      %28 = vsyncadd [#allocation5], %s27
      %s29 = sshll.u32 [#allocation4], 4
      %s30 = int_to_ptr.vmem [resolvable:$true] %s29
      %35 = dma.hbm_to_vmem [thread:$0]  %s5, 8192, %s30, [#allocation5], 512, 512, 32
    $region25: #{gesture_recognition_forward.1} parent=1 // pred_fallthru
      _
    // Predicated region
    $region26: #{gesture_recognition_forward.1} parent=1 // pred_check
      _
    $region27: #{gesture_recognition_forward.1} parent=1 // pred_check_branch
      %37 = sbr.rel (0) target = $region29
    $region28: #{gesture_recognition_forward.1} parent=1 // pred_region
      _
    $region29: #{gesture_recognition_forward.1} parent=1 // pred_fallthru
      _
    // Predicated region
    $region30: #{gesture_recognition_forward.1} parent=1 // pred_check
      _
    $region31: #{gesture_recognition_forward.1} parent=1 // pred_check_branch
      %39 = sbr.rel (0) target = $region33
    $region32: #{gesture_recognition_forward.1} parent=1 // pred_region
      _
    $region33: #{gesture_recognition_forward.1} parent=1 // pred_fallthru
      _
    // Predicated region
    $region34: #{gesture_recognition_forward.1} parent=1 // pred_check
      _
    $region35: #{gesture_recognition_forward.1} parent=1 // pred_check_branch
      %41 = sbr.rel (0) target = $region37
    $region36: #{gesture_recognition_forward.1} parent=1 // pred_region
      %42 = dma.done [#allocation5], 8192
    $region37: #{gesture_recognition_forward.1} parent=1 // pred_fallthru
      _
    %v43 = vld [vmem:[%s0] sm:$0xff]
    %v44 = vld [vmem:[%s0 + $0x8] sm:$0xff]
    %v45 = vld [vmem:[%s0 + $0x10] sm:$0xff]
    %v46 = vld [vmem:[%s0 + $0x18] sm:$0xff]
    %v47 = vld [vmem:[%s0 + $0x20] sm:$0xff]
    %v48 = vld [vmem:[%s0 + $0x28] sm:$0xff]
    %v49 = vld [vmem:[%s0 + $0x30] sm:$0xff]
    %v50 = vld [vmem:[%s0 + $0x38] sm:$0xff]
    %v51 = vld [vmem:[%s1] sm:$0xff]
    %v52 = vld [vmem:[%s1 + $0x8] sm:$0xff]
    %v53 = vld [vmem:[%s1 + $0x10] sm:$0xff]
    %v54 = vld [vmem:[%s1 + $0x18] sm:$0xff]
    %v55 = vld [vmem:[%s1 + $0x20] sm:$0xff]
    %v56 = vld [vmem:[%s1 + $0x28] sm:$0xff]
    %v57 = vld [vmem:[%s1 + $0x30] sm:$0xff]
    %v58 = vld [vmem:[%s1 + $0x38] sm:$0xff]
    %v59 = vld [vmem:[%s1 + $0x40] sm:$0xff]
    %v60 = vld [vmem:[%s1 + $0x48] sm:$0xff]
    %v61 = vld [vmem:[%s1 + $0x50] sm:$0xff]
    %v62 = vld [vmem:[%s1 + $0x58] sm:$0xff]
    %v63 = vld [vmem:[%s1 + $0x60] sm:$0xff]
    %v64 = vld [vmem:[%s1 + $0x68] sm:$0xff]
    %v65 = vld [vmem:[%s1 + $0x70] sm:$0xff]
    %v66 = vld [vmem:[%s1 + $0x78] sm:$0xff]
    %v67 = vld [vmem:[%s2] sm:$0x1]
    %v69 = vlaneseq
    %v70 = vshrl.u32 %v69, 7
    %v71 = vsub.s32 0, %v70
    %v72 = vrot.slane %v67, %v71
    %74 = vmatprep.subr.mxu0 0.0
    %75 = vmatpush1.msra.mxu0 %v51
    %76 = vmatprep.subr.mxu0 0.0
    %77 = vmatpush1.msra.mxu0 %v52
    %78 = vmatprep.subr.mxu0 0.0
    %79 = vmatpush1.msra.mxu0 %v53
    %80 = vmatprep.subr.mxu0 0.0
    %81 = vmatpush1.msra.mxu0 %v54
    %82 = vmatprep.subr.mxu0 0.0
    %83 = vmatpush1.msra.mxu0 %v55
    %84 = vmatprep.subr.mxu0 0.0
    %85 = vmatpush1.msra.mxu0 %v56
    %86 = vmatprep.subr.mxu0 0.0
    %87 = vmatpush1.msra.mxu0 %v57
    %88 = vmatprep.subr.mxu0 0.0
    %89 = vmatpush1.msra.mxu0 %v58
    %90 = vmatprep.subr.mxu0 0.0
    %91 = vmatpush1.msra.mxu0 %v59
    %92 = vmatprep.subr.mxu0 0.0
    %93 = vmatpush1.msra.mxu0 %v60
    %94 = vmatprep.subr.mxu0 0.0
    %95 = vmatpush1.msra.mxu0 %v61
    %96 = vmatprep.subr.mxu0 0.0
    %97 = vmatpush1.msra.mxu0 %v62
    %98 = vmatprep.subr.mxu0 0.0
    %99 = vmatpush1.msra.mxu0 %v63
    %100 = vmatprep.subr.mxu0 0.0
    %101 = vmatpush1.msra.mxu0 %v64
    %102 = vmatprep.subr.mxu0 0.0
    %103 = vmatpush1.msra.mxu0 %v65
    %104 = vmatprep.subr.mxu0 0.0
    %105 = vmatpush1.msra.mxu0 %v66
    %106 = vmatprep.subr.mxu0 0.0
    %107 = vmatpush1.msra.mxu0 0.0
    %108 = vmatprep.subr.mxu0 0.0
    %109 = vmatpush1.msra.mxu0 0.0
    %110 = vmatprep.subr.mxu0 0.0
    %111 = vmatpush1.msra.mxu0 0.0
    %112 = vmatprep.subr.mxu0 0.0
    %113 = vmatpush1.msra.mxu0 0.0
    %114 = vmatprep.subr.mxu0 0.0
    %115 = vmatpush1.msra.mxu0 0.0
    %116 = vmatprep.subr.mxu0 0.0
    %117 = vmatpush1.msra.mxu0 0.0
    %118 = vmatprep.subr.mxu0 0.0
    %119 = vmatpush1.msra.mxu0 0.0
    %120 = vmatprep.subr.mxu0 0.0
    %121 = vmatpush1.msra.mxu0 0.0
    %122 = vmatprep.subr.mxu0 0.0
    %123 = vmatpush1.msra.mxu0 0.0
    %124 = vmatprep.subr.mxu0 0.0
    %125 = vmatpush1.msra.mxu0 0.0
    %126 = vmatprep.subr.mxu0 0.0
    %127 = vmatpush1.msra.mxu0 0.0
    %128 = vmatprep.subr.mxu0 0.0
    %129 = vmatpush1.msra.mxu0 0.0
    %130 = vmatprep.subr.mxu0 0.0
    %131 = vmatpush1.msra.mxu0 0.0
    %132 = vmatprep.subr.mxu0 0.0
    %133 = vmatpush1.msra.mxu0 0.0
    %134 = vmatprep.subr.mxu0 0.0
    %135 = vmatpush1.msra.mxu0 0.0
    %136 = vmatprep.subr.mxu0 0.0
    %137 = vmatpush1.msra.mxu0 0.0
    %138 = vmatprep.mubr.f32.mxu0 0.0
    %139 = vmatmul.mubr.f32.gmra.mrb[0].mxu0 %v43
    %v140 = vpop.f32.mrb[0].mxu0
    %v141 = vadd.f32 %v72, %v140
    %v142 = vpop.f32.mrb[0].mxu0
    %143 = vmatprep.mubr.f32.mxu0 0.0
    %144 = vmatmul.mubr.f32.gmra.mrb[0].mxu0 %v44
    %v145 = vpop.f32.mrb[0].mxu0
    %v146 = vadd.f32 %v72, %v145
    %v147 = vpop.f32.mrb[0].mxu0
    %148 = vmatprep.mubr.f32.mxu0 0.0
    %149 = vmatmul.mubr.f32.gmra.mrb[0].mxu0 %v45
    %v150 = vpop.f32.mrb[0].mxu0
    %v151 = vadd.f32 %v72, %v150
    %v152 = vpop.f32.mrb[0].mxu0
    %153 = vmatprep.mubr.f32.mxu0 0.0
    %154 = vmatmul.mubr.f32.gmra.mrb[0].mxu0 %v46
    %v155 = vpop.f32.mrb[0].mxu0
    %v156 = vadd.f32 %v72, %v155
    %v157 = vpop.f32.mrb[0].mxu0
    %158 = vmatprep.mubr.f32.mxu0 0.0
    %159 = vmatmul.mubr.f32.gmra.mrb[0].mxu0 %v47
    %v160 = vpop.f32.mrb[0].mxu0
    %v161 = vadd.f32 %v72, %v160
    %v162 = vpop.f32.mrb[0].mxu0
    %163 = vmatprep.mubr.f32.mxu0 0.0
    %164 = vmatmul.mubr.f32.gmra.mrb[0].mxu0 %v48
    %v165 = vpop.f32.mrb[0].mxu0
    %v166 = vadd.f32 %v72, %v165
    %v167 = vpop.f32.mrb[0].mxu0
    %168 = vmatprep.mubr.f32.mxu0 0.0
    %169 = vmatmul.mubr.f32.gmra.mrb[0].mxu0 %v49
    %v170 = vpop.f32.mrb[0].mxu0
    %v171 = vadd.f32 %v72, %v170
    %v172 = vpop.f32.mrb[0].mxu0
    %173 = vmatprep.mubr.f32.mxu0 0.0
    %174 = vmatmul.mubr.f32.gmra.mrb[0].mxu0 %v50
    %v175 = vpop.f32.mrb[0].mxu0
    %v176 = vadd.f32 %v72, %v175
    %v177 = vpop.f32.mrb[0].mxu0
    %178 = vdwg.mxu0
    %v179 = vmax.f32 %v141, 0.0
    %v180 = vmax.f32 %v146, 0.0
    %v181 = vmax.f32 %v151, 0.0
    %v182 = vmax.f32 %v156, 0.0
    %v183 = vmax.f32 %v161, 0.0
    %v184 = vmax.f32 %v166, 0.0
    %v185 = vmax.f32 %v171, 0.0
    %v186 = vmax.f32 %v176, 0.0
    %v187 = vld [vmem:[%s3] sm:$0xff]
    %v188 = vld [vmem:[%s3 + $0x8] sm:$0xff]
    %v189 = vld [vmem:[%s3 + $0x10] sm:$0xff]
    %v190 = vld [vmem:[%s3 + $0x18] sm:$0xff]
    %v191 = vld [vmem:[%s3 + $0x20] sm:$0xff]
    %v192 = vld [vmem:[%s3 + $0x28] sm:$0xff]
    %v193 = vld [vmem:[%s3 + $0x30] sm:$0xff]
    %v194 = vld [vmem:[%s3 + $0x38] sm:$0xff]
    %v195 = vld [vmem:[%s3 + $0x40] sm:$0xff]
    %v196 = vld [vmem:[%s3 + $0x48] sm:$0xff]
    %v197 = vld [vmem:[%s3 + $0x50] sm:$0xff]
    %v198 = vld [vmem:[%s3 + $0x58] sm:$0xff]
    %v199 = vld [vmem:[%s3 + $0x60] sm:$0xff]
    %v200 = vld [vmem:[%s3 + $0x68] sm:$0xff]
    %v201 = vld [vmem:[%s3 + $0x70] sm:$0xff]
    %v202 = vld [vmem:[%s3 + $0x78] sm:$0xff]
    %v203 = vld [vmem:[%s3 + $0x80] sm:$0xff]
    %v204 = vld [vmem:[%s3 + $0x88] sm:$0xff]
    %v205 = vld [vmem:[%s3 + $0x90] sm:$0xff]
    %v206 = vld [vmem:[%s3 + $0x98] sm:$0xff]
    %v207 = vld [vmem:[%s3 + $0xa0] sm:$0xff]
    %v208 = vld [vmem:[%s3 + $0xa8] sm:$0xff]
    %v209 = vld [vmem:[%s3 + $0xb0] sm:$0xff]
    %v210 = vld [vmem:[%s3 + $0xb8] sm:$0xff]
    %v211 = vld [vmem:[%s3 + $0xc0] sm:$0xff]
    %v212 = vld [vmem:[%s3 + $0xc8] sm:$0xff]
    %v213 = vld [vmem:[%s3 + $0xd0] sm:$0xff]
    %v214 = vld [vmem:[%s3 + $0xd8] sm:$0xff]
    %v215 = vld [vmem:[%s3 + $0xe0] sm:$0xff]
    %v216 = vld [vmem:[%s3 + $0xe8] sm:$0xff]
    %v217 = vld [vmem:[%s3 + $0xf0] sm:$0xff]
    %v218 = vld [vmem:[%s3 + $0xf8] sm:$0xff]
    %v219 = vld [vmem:[%s3 + $0x100] sm:$0xff]
    %v220 = vld [vmem:[%s3 + $0x108] sm:$0xff]
    %v221 = vld [vmem:[%s3 + $0x110] sm:$0xff]
    %v222 = vld [vmem:[%s3 + $0x118] sm:$0xff]
    %v223 = vld [vmem:[%s3 + $0x120] sm:$0xff]
    %v224 = vld [vmem:[%s3 + $0x128] sm:$0xff]
    %v225 = vld [vmem:[%s3 + $0x130] sm:$0xff]
    %v226 = vld [vmem:[%s3 + $0x138] sm:$0xff]
    %v227 = vld [vmem:[%s3 + $0x140] sm:$0xff]
    %v228 = vld [vmem:[%s3 + $0x148] sm:$0xff]
    %v229 = vld [vmem:[%s3 + $0x150] sm:$0xff]
    %v230 = vld [vmem:[%s3 + $0x158] sm:$0xff]
    %v231 = vld [vmem:[%s3 + $0x160] sm:$0xff]
    %v232 = vld [vmem:[%s3 + $0x168] sm:$0xff]
    %v233 = vld [vmem:[%s3 + $0x170] sm:$0xff]
    %v234 = vld [vmem:[%s3 + $0x178] sm:$0xff]
    %v235 = vld [vmem:[%s3 + $0x180] sm:$0xff]
    %v236 = vld [vmem:[%s3 + $0x188] sm:$0xff]
    %v237 = vld [vmem:[%s3 + $0x190] sm:$0xff]
    %v238 = vld [vmem:[%s3 + $0x198] sm:$0xff]
    %v239 = vld [vmem:[%s3 + $0x1a0] sm:$0xff]
    %v240 = vld [vmem:[%s3 + $0x1a8] sm:$0xff]
    %v241 = vld [vmem:[%s3 + $0x1b0] sm:$0xff]
    %v242 = vld [vmem:[%s3 + $0x1b8] sm:$0xff]
    %v243 = vld [vmem:[%s3 + $0x1c0] sm:$0xff]
    %v244 = vld [vmem:[%s3 + $0x1c8] sm:$0xff]
    %v245 = vld [vmem:[%s3 + $0x1d0] sm:$0xff]
    %v246 = vld [vmem:[%s3 + $0x1d8] sm:$0xff]
    %v247 = vld [vmem:[%s3 + $0x1e0] sm:$0xff]
    %v248 = vld [vmem:[%s3 + $0x1e8] sm:$0xff]
    %v249 = vld [vmem:[%s3 + $0x1f0] sm:$0xff]
    %v250 = vld [vmem:[%s3 + $0x1f8] sm:$0xff]
    %v251 = vld [vmem:[%s4] sm:$0xf]
    %v253 = vlaneseq
    %v254 = vshrl.u32 %v253, 7
    %v255 = vsub.s32 0, %v254
    %v256 = vrot.slane %v251, %v255
    %v257 = vlaneseq
    %v258 = vshrl.u32 %v257, 7
    %v259 = vsub.s32 1, %v258
    %v260 = vrot.slane %v251, %v259
    %v261 = vlaneseq
    %v262 = vshrl.u32 %v261, 7
    %v263 = vsub.s32 2, %v262
    %v264 = vrot.slane %v251, %v263
    %v265 = vlaneseq
    %v266 = vshrl.u32 %v265, 7
    %v267 = vsub.s32 3, %v266
    %v268 = vrot.slane %v251, %v267
    %273 = vmatprep.subr.mxu0 %v188
    %274 = vmatpush1.msra.mxu0 %v187
    %275 = vmatprep.subr.mxu0 %v192
    %276 = vmatpush1.msra.mxu0 %v191
    %277 = vmatprep.subr.mxu0 %v196
    %278 = vmatpush1.msra.mxu0 %v195
    %279 = vmatprep.subr.mxu0 %v200
    %280 = vmatpush1.msra.mxu0 %v199
    %281 = vmatprep.subr.mxu0 %v204
    %282 = vmatpush1.msra.mxu0 %v203
    %283 = vmatprep.subr.mxu0 %v208
    %284 = vmatpush1.msra.mxu0 %v207
    %285 = vmatprep.subr.mxu0 %v212
    %286 = vmatpush1.msra.mxu0 %v211
    %287 = vmatprep.subr.mxu0 %v216
    %288 = vmatpush1.msra.mxu0 %v215
    %289 = vmatprep.subr.mxu0 %v220
    %290 = vmatpush1.msra.mxu0 %v219
    %291 = vmatprep.subr.mxu0 %v224
    %292 = vmatpush1.msra.mxu0 %v223
    %293 = vmatprep.subr.mxu0 %v228
    %294 = vmatpush1.msra.mxu0 %v227
    %295 = vmatprep.subr.mxu0 %v232
    %296 = vmatpush1.msra.mxu0 %v231
    %297 = vmatprep.subr.mxu0 %v236
    %298 = vmatpush1.msra.mxu0 %v235
    %299 = vmatprep.subr.mxu0 %v240
    %300 = vmatpush1.msra.mxu0 %v239
    %301 = vmatprep.subr.mxu0 %v244
    %302 = vmatpush1.msra.mxu0 %v243
    %303 = vmatprep.subr.mxu0 %v248
    %304 = vmatpush1.msra.mxu0 %v247
    %305 = vmatprep.subr.mxu0 0.0
    %306 = vmatpush1.msra.mxu0 0.0
    %307 = vmatprep.subr.mxu0 0.0
    %308 = vmatpush1.msra.mxu0 0.0
    %309 = vmatprep.subr.mxu0 0.0
    %310 = vmatpush1.msra.mxu0 0.0
    %311 = vmatprep.subr.mxu0 0.0
    %312 = vmatpush1.msra.mxu0 0.0
    %313 = vmatprep.subr.mxu0 0.0
    %314 = vmatpush1.msra.mxu0 0.0
    %315 = vmatprep.subr.mxu0 0.0
    %316 = vmatpush1.msra.mxu0 0.0
    %317 = vmatprep.subr.mxu0 0.0
    %318 = vmatpush1.msra.mxu0 0.0
    %319 = vmatprep.subr.mxu0 0.0
    %320 = vmatpush1.msra.mxu0 0.0
    %321 = vmatprep.subr.mxu0 0.0
    %322 = vmatpush1.msra.mxu0 0.0
    %323 = vmatprep.subr.mxu0 0.0
    %324 = vmatpush1.msra.mxu0 0.0
    %325 = vmatprep.subr.mxu0 0.0
    %326 = vmatpush1.msra.mxu0 0.0
    %327 = vmatprep.subr.mxu0 0.0
    %328 = vmatpush1.msra.mxu0 0.0
    %329 = vmatprep.subr.mxu0 0.0
    %330 = vmatpush1.msra.mxu0 0.0
    %331 = vmatprep.subr.mxu0 0.0
    %332 = vmatpush1.msra.mxu0 0.0
    %333 = vmatprep.subr.mxu0 0.0
    %334 = vmatpush1.msra.mxu0 0.0
    %335 = vmatprep.subr.mxu0 0.0
    %336 = vmatpush1.msra.mxu0 0.0
    %337 = vmatprep.mubr.f32.mxu0 0.0
    %338 = vmatmul.mubr.f32.gmra.mrb[0].mxu0 %v179
    %v339 = vpop.f32.mrb[0].mxu0
    %v340 = vadd.f32 %v256, %v339
    %v341 = vpop.f32.mrb[0].mxu0
    %v342 = vadd.f32 %v260, %v341
    %343 = vmatprep.mubr.f32.mxu0 0.0
    %344 = vmatmul.mubr.f32.gmra.mrb[0].mxu0 %v180
    %v345 = vpop.f32.mrb[0].mxu0
    %v346 = vadd.f32 %v256, %v345
    %v347 = vpop.f32.mrb[0].mxu0
    %v348 = vadd.f32 %v260, %v347
    %349 = vmatprep.mubr.f32.mxu0 0.0
    %350 = vmatmul.mubr.f32.gmra.mrb[0].mxu0 %v181
    %v351 = vpop.f32.mrb[0].mxu0
    %v352 = vadd.f32 %v256, %v351
    %v353 = vpop.f32.mrb[0].mxu0
    %v354 = vadd.f32 %v260, %v353
    %355 = vmatprep.mubr.f32.mxu0 0.0
    %356 = vmatmul.mubr.f32.gmra.mrb[0].mxu0 %v182
    %v357 = vpop.f32.mrb[0].mxu0
    %v358 = vadd.f32 %v256, %v357
    %v359 = vpop.f32.mrb[0].mxu0
    %v360 = vadd.f32 %v260, %v359
    %361 = vmatprep.mubr.f32.mxu0 0.0
    %362 = vmatmul.mubr.f32.gmra.mrb[0].mxu0 %v183
    %v363 = vpop.f32.mrb[0].mxu0
    %v364 = vadd.f32 %v256, %v363
    %v365 = vpop.f32.mrb[0].mxu0
    %v366 = vadd.f32 %v260, %v365
    %367 = vmatprep.mubr.f32.mxu0 0.0
    %368 = vmatmul.mubr.f32.gmra.mrb[0].mxu0 %v184
    %v369 = vpop.f32.mrb[0].mxu0
    %v370 = vadd.f32 %v256, %v369
    %v371 = vpop.f32.mrb[0].mxu0
    %v372 = vadd.f32 %v260, %v371
    %373 = vmatprep.mubr.f32.mxu0 0.0
    %374 = vmatmul.mubr.f32.gmra.mrb[0].mxu0 %v185
    %v375 = vpop.f32.mrb[0].mxu0
    %v376 = vadd.f32 %v256, %v375
    %v377 = vpop.f32.mrb[0].mxu0
    %v378 = vadd.f32 %v260, %v377
    %379 = vmatprep.mubr.f32.mxu0 0.0
    %380 = vmatmul.mubr.f32.gmra.mrb[0].mxu0 %v186
    %v381 = vpop.f32.mrb[0].mxu0
    %v382 = vadd.f32 %v256, %v381
    %v383 = vpop.f32.mrb[0].mxu0
    %v384 = vadd.f32 %v260, %v383
    %385 = vdwg.mxu0
    %386 = vmatprep.subr.mxu0 %v190
    %387 = vmatpush1.msra.mxu0 %v189
    %388 = vmatprep.subr.mxu0 %v194
    %389 = vmatpush1.msra.mxu0 %v193
    %390 = vmatprep.subr.mxu0 %v198
    %391 = vmatpush1.msra.mxu0 %v197
    %392 = vmatprep.subr.mxu0 %v202
    %393 = vmatpush1.msra.mxu0 %v201
    %394 = vmatprep.subr.mxu0 %v206
    %395 = vmatpush1.msra.mxu0 %v205
    %396 = vmatprep.subr.mxu0 %v210
    %397 = vmatpush1.msra.mxu0 %v209
    %398 = vmatprep.subr.mxu0 %v214
    %399 = vmatpush1.msra.mxu0 %v213
    %400 = vmatprep.subr.mxu0 %v218
    %401 = vmatpush1.msra.mxu0 %v217
    %402 = vmatprep.subr.mxu0 %v222
    %403 = vmatpush1.msra.mxu0 %v221
    %404 = vmatprep.subr.mxu0 %v226
    %405 = vmatpush1.msra.mxu0 %v225
    %406 = vmatprep.subr.mxu0 %v230
    %407 = vmatpush1.msra.mxu0 %v229
    %408 = vmatprep.subr.mxu0 %v234
    %409 = vmatpush1.msra.mxu0 %v233
    %410 = vmatprep.subr.mxu0 %v238
    %411 = vmatpush1.msra.mxu0 %v237
    %412 = vmatprep.subr.mxu0 %v242
    %413 = vmatpush1.msra.mxu0 %v241
    %414 = vmatprep.subr.mxu0 %v246
    %415 = vmatpush1.msra.mxu0 %v245
    %416 = vmatprep.subr.mxu0 %v250
    %417 = vmatpush1.msra.mxu0 %v249
    %418 = vmatprep.subr.mxu0 0.0
    %419 = vmatpush1.msra.mxu0 0.0
    %420 = vmatprep.subr.mxu0 0.0
    %421 = vmatpush1.msra.mxu0 0.0
    %422 = vmatprep.subr.mxu0 0.0
    %423 = vmatpush1.msra.mxu0 0.0
    %424 = vmatprep.subr.mxu0 0.0
    %425 = vmatpush1.msra.mxu0 0.0
    %426 = vmatprep.subr.mxu0 0.0
    %427 = vmatpush1.msra.mxu0 0.0
    %428 = vmatprep.subr.mxu0 0.0
    %429 = vmatpush1.msra.mxu0 0.0
    %430 = vmatprep.subr.mxu0 0.0
    %431 = vmatpush1.msra.mxu0 0.0
    %432 = vmatprep.subr.mxu0 0.0
    %433 = vmatpush1.msra.mxu0 0.0
    %434 = vmatprep.subr.mxu0 0.0
    %435 = vmatpush1.msra.mxu0 0.0
    %436 = vmatprep.subr.mxu0 0.0
    %437 = vmatpush1.msra.mxu0 0.0
    %438 = vmatprep.subr.mxu0 0.0
    %439 = vmatpush1.msra.mxu0 0.0
    %440 = vmatprep.subr.mxu0 0.0
    %441 = vmatpush1.msra.mxu0 0.0
    %442 = vmatprep.subr.mxu0 0.0
    %443 = vmatpush1.msra.mxu0 0.0
    %444 = vmatprep.subr.mxu0 0.0
    %445 = vmatpush1.msra.mxu0 0.0
    %446 = vmatprep.subr.mxu0 0.0
    %447 = vmatpush1.msra.mxu0 0.0
    %448 = vmatprep.subr.mxu0 0.0
    %449 = vmatpush1.msra.mxu0 0.0
    %450 = vmatprep.mubr.f32.mxu0 0.0
    %451 = vmatmul.mubr.f32.gmra.mrb[0].mxu0 %v179
    %v452 = vpop.f32.mrb[0].mxu0
    %v453 = vadd.f32 %v264, %v452
    %v454 = vpop.f32.mrb[0].mxu0
    %v455 = vadd.f32 %v268, %v454
    %456 = vmatprep.mubr.f32.mxu0 0.0
    %457 = vmatmul.mubr.f32.gmra.mrb[0].mxu0 %v180
    %v458 = vpop.f32.mrb[0].mxu0
    %v459 = vadd.f32 %v264, %v458
    %v460 = vpop.f32.mrb[0].mxu0
    %v461 = vadd.f32 %v268, %v460
    %462 = vmatprep.mubr.f32.mxu0 0.0
    %463 = vmatmul.mubr.f32.gmra.mrb[0].mxu0 %v181
    %v464 = vpop.f32.mrb[0].mxu0
    %v465 = vadd.f32 %v264, %v464
    %v466 = vpop.f32.mrb[0].mxu0
    %v467 = vadd.f32 %v268, %v466
    %468 = vmatprep.mubr.f32.mxu0 0.0
    %469 = vmatmul.mubr.f32.gmra.mrb[0].mxu0 %v182
    %v470 = vpop.f32.mrb[0].mxu0
    %v471 = vadd.f32 %v264, %v470
    %v472 = vpop.f32.mrb[0].mxu0
    %v473 = vadd.f32 %v268, %v472
    %474 = vmatprep.mubr.f32.mxu0 0.0
    %475 = vmatmul.mubr.f32.gmra.mrb[0].mxu0 %v183
    %v476 = vpop.f32.mrb[0].mxu0
    %v477 = vadd.f32 %v264, %v476
    %v478 = vpop.f32.mrb[0].mxu0
    %v479 = vadd.f32 %v268, %v478
    %480 = vmatprep.mubr.f32.mxu0 0.0
    %481 = vmatmul.mubr.f32.gmra.mrb[0].mxu0 %v184
    %v482 = vpop.f32.mrb[0].mxu0
    %v483 = vadd.f32 %v264, %v482
    %v484 = vpop.f32.mrb[0].mxu0
    %v485 = vadd.f32 %v268, %v484
    %486 = vmatprep.mubr.f32.mxu0 0.0
    %487 = vmatmul.mubr.f32.gmra.mrb[0].mxu0 %v185
    %v488 = vpop.f32.mrb[0].mxu0
    %v489 = vadd.f32 %v264, %v488
    %v490 = vpop.f32.mrb[0].mxu0
    %v491 = vadd.f32 %v268, %v490
    %492 = vmatprep.mubr.f32.mxu0 0.0
    %493 = vmatmul.mubr.f32.gmra.mrb[0].mxu0 %v186
    %v494 = vpop.f32.mrb[0].mxu0
    %v495 = vadd.f32 %v264, %v494
    %v496 = vpop.f32.mrb[0].mxu0
    %v497 = vadd.f32 %v268, %v496
    %498 = vdwg.mxu0
    %499 = vst [vmem:[#allocation2] sm:$0xff] %v340
    %500 = vst [vmem:[#allocation2 + $0x8] sm:$0xff] %v342
    %501 = vst [vmem:[#allocation2 + $0x10] sm:$0xff] %v453
    %502 = vst [vmem:[#allocation2 + $0x18] sm:$0xff] %v455
    %503 = vst [vmem:[#allocation2 + $0x20] sm:$0xff] %v346
    %504 = vst [vmem:[#allocation2 + $0x28] sm:$0xff] %v348
    %505 = vst [vmem:[#allocation2 + $0x30] sm:$0xff] %v459
    %506 = vst [vmem:[#allocation2 + $0x38] sm:$0xff] %v461
    %507 = vst [vmem:[#allocation2 + $0x40] sm:$0xff] %v352
    %508 = vst [vmem:[#allocation2 + $0x48] sm:$0xff] %v354
    %509 = vst [vmem:[#allocation2 + $0x50] sm:$0xff] %v465
    %510 = vst [vmem:[#allocation2 + $0x58] sm:$0xff] %v467
    %511 = vst [vmem:[#allocation2 + $0x60] sm:$0xff] %v358
    %512 = vst [vmem:[#allocation2 + $0x68] sm:$0xff] %v360
    %513 = vst [vmem:[#allocation2 + $0x70] sm:$0xff] %v471
    %514 = vst [vmem:[#allocation2 + $0x78] sm:$0xff] %v473
    %515 = vst [vmem:[#allocation2 + $0x80] sm:$0xff] %v364
    %516 = vst [vmem:[#allocation2 + $0x88] sm:$0xff] %v366
    %517 = vst [vmem:[#allocation2 + $0x90] sm:$0xff] %v477
    %518 = vst [vmem:[#allocation2 + $0x98] sm:$0xff] %v479
    %519 = vst [vmem:[#allocation2 + $0xa0] sm:$0xff] %v370
    %520 = vst [vmem:[#allocation2 + $0xa8] sm:$0xff] %v372
    %521 = vst [vmem:[#allocation2 + $0xb0] sm:$0xff] %v483
    %522 = vst [vmem:[#allocation2 + $0xb8] sm:$0xff] %v485
    %523 = vst [vmem:[#allocation2 + $0xc0] sm:$0xff] %v376
    %524 = vst [vmem:[#allocation2 + $0xc8] sm:$0xff] %v378
    %525 = vst [vmem:[#allocation2 + $0xd0] sm:$0xff] %v489
    %526 = vst [vmem:[#allocation2 + $0xd8] sm:$0xff] %v491
    %527 = vst [vmem:[#allocation2 + $0xe0] sm:$0xff] %v382
    %528 = vst [vmem:[#allocation2 + $0xe8] sm:$0xff] %v384
    %529 = vst [vmem:[#allocation2 + $0xf0] sm:$0xff] %v495
    %530 = vst [vmem:[#allocation2 + $0xf8] sm:$0xff] %v497
    %v531 = vld [vmem:[#allocation4] sm:$0xff]
    %v532 = vld [vmem:[#allocation4 + $0x8] sm:$0xff]
    %v533 = vld [vmem:[#allocation4 + $0x10] sm:$0xff]
    %v534 = vld [vmem:[#allocation4 + $0x18] sm:$0xff]
    %v535 = vld [vmem:[#allocation4 + $0x20] sm:$0xff]
    %v536 = vld [vmem:[#allocation4 + $0x28] sm:$0xff]
    %v537 = vld [vmem:[#allocation4 + $0x30] sm:$0xff]
    %v538 = vld [vmem:[#allocation4 + $0x38] sm:$0xff]
    %v539 = vld [vmem:[#allocation4 + $0x40] sm:$0xff]
    %v540 = vld [vmem:[#allocation4 + $0x48] sm:$0xff]
    %v541 = vld [vmem:[#allocation4 + $0x50] sm:$0xff]
    %v542 = vld [vmem:[#allocation4 + $0x58] sm:$0xff]
    %v543 = vld [vmem:[#allocation4 + $0x60] sm:$0xff]
    %v544 = vld [vmem:[#allocation4 + $0x68] sm:$0xff]
    %v545 = vld [vmem:[#allocation4 + $0x70] sm:$0xff]
    %v546 = vld [vmem:[#allocation4 + $0x78] sm:$0xff]
    %v547 = vld [vmem:[#allocation4 + $0x80] sm:$0xff]
    %v548 = vld [vmem:[#allocation4 + $0x88] sm:$0xff]
    %v549 = vld [vmem:[#allocation4 + $0x90] sm:$0xff]
    %v550 = vld [vmem:[#allocation4 + $0x98] sm:$0xff]
    %v551 = vld [vmem:[#allocation4 + $0xa0] sm:$0xff]
    %v552 = vld [vmem:[#allocation4 + $0xa8] sm:$0xff]
    %v553 = vld [vmem:[#allocation4 + $0xb0] sm:$0xff]
    %v554 = vld [vmem:[#allocation4 + $0xb8] sm:$0xff]
    %v555 = vld [vmem:[#allocation4 + $0xc0] sm:$0xff]
    %v556 = vld [vmem:[#allocation4 + $0xc8] sm:$0xff]
    %v557 = vld [vmem:[#allocation4 + $0xd0] sm:$0xff]
    %v558 = vld [vmem:[#allocation4 + $0xd8] sm:$0xff]
    %v559 = vld [vmem:[#allocation4 + $0xe0] sm:$0xff]
    %v560 = vld [vmem:[#allocation4 + $0xe8] sm:$0xff]
    %v561 = vld [vmem:[#allocation4 + $0xf0] sm:$0xff]
    %v562 = vld [vmem:[#allocation4 + $0xf8] sm:$0xff]
    %v563 = vld [vmem:[#allocation4 + $0x100] sm:$0xff]
    %v564 = vld [vmem:[#allocation4 + $0x108] sm:$0xff]
    %v565 = vld [vmem:[#allocation4 + $0x110] sm:$0xff]
    %v566 = vld [vmem:[#allocation4 + $0x118] sm:$0xff]
    %v567 = vld [vmem:[#allocation4 + $0x120] sm:$0xff]
    %v568 = vld [vmem:[#allocation4 + $0x128] sm:$0xff]
    %v569 = vld [vmem:[#allocation4 + $0x130] sm:$0xff]
    %v570 = vld [vmem:[#allocation4 + $0x138] sm:$0xff]
    %v571 = vld [vmem:[#allocation4 + $0x140] sm:$0xff]
    %v572 = vld [vmem:[#allocation4 + $0x148] sm:$0xff]
    %v573 = vld [vmem:[#allocation4 + $0x150] sm:$0xff]
    %v574 = vld [vmem:[#allocation4 + $0x158] sm:$0xff]
    %v575 = vld [vmem:[#allocation4 + $0x160] sm:$0xff]
    %v576 = vld [vmem:[#allocation4 + $0x168] sm:$0xff]
    %v577 = vld [vmem:[#allocation4 + $0x170] sm:$0xff]
    %v578 = vld [vmem:[#allocation4 + $0x178] sm:$0xff]
    %v579 = vld [vmem:[#allocation4 + $0x180] sm:$0xff]
    %v580 = vld [vmem:[#allocation4 + $0x188] sm:$0xff]
    %v581 = vld [vmem:[#allocation4 + $0x190] sm:$0xff]
    %v582 = vld [vmem:[#allocation4 + $0x198] sm:$0xff]
    %v583 = vld [vmem:[#allocation4 + $0x1a0] sm:$0xff]
    %v584 = vld [vmem:[#allocation4 + $0x1a8] sm:$0xff]
    %v585 = vld [vmem:[#allocation4 + $0x1b0] sm:$0xff]
    %v586 = vld [vmem:[#allocation4 + $0x1b8] sm:$0xff]
    %v587 = vld [vmem:[#allocation4 + $0x1c0] sm:$0xff]
    %v588 = vld [vmem:[#allocation4 + $0x1c8] sm:$0xff]
    %v589 = vld [vmem:[#allocation4 + $0x1d0] sm:$0xff]
    %v590 = vld [vmem:[#allocation4 + $0x1d8] sm:$0xff]
    %v591 = vld [vmem:[#allocation4 + $0x1e0] sm:$0xff]
    %v592 = vld [vmem:[#allocation4 + $0x1e8] sm:$0xff]
    %v593 = vld [vmem:[#allocation4 + $0x1f0] sm:$0xff]
    %v594 = vld [vmem:[#allocation4 + $0x1f8] sm:$0xff]
    %v595 = vld [vmem:[#allocation2] sm:$0xff]
    %v596 = vld [vmem:[#allocation2 + $0x8] sm:$0xff]
    %v597 = vld [vmem:[#allocation2 + $0x10] sm:$0xff]
    %v598 = vld [vmem:[#allocation2 + $0x18] sm:$0xff]
    %599 = vmatprep.subr.mxu0 %v532
    %600 = vmatpush1.msra.mxu0 %v531
    %601 = vmatprep.subr.mxu0 %v536
    %602 = vmatpush1.msra.mxu0 %v535
    %603 = vmatprep.subr.mxu0 %v540
    %604 = vmatpush1.msra.mxu0 %v539
    %605 = vmatprep.subr.mxu0 %v544
    %606 = vmatpush1.msra.mxu0 %v543
    %607 = vmatprep.subr.mxu0 %v548
    %608 = vmatpush1.msra.mxu0 %v547
    %609 = vmatprep.subr.mxu0 %v552
    %610 = vmatpush1.msra.mxu0 %v551
    %611 = vmatprep.subr.mxu0 %v556
    %612 = vmatpush1.msra.mxu0 %v555
    %613 = vmatprep.subr.mxu0 %v560
    %614 = vmatpush1.msra.mxu0 %v559
    %615 = vmatprep.subr.mxu0 %v564
    %616 = vmatpush1.msra.mxu0 %v563
    %617 = vmatprep.subr.mxu0 %v568
    %618 = vmatpush1.msra.mxu0 %v567
    %619 = vmatprep.subr.mxu0 %v572
    %620 = vmatpush1.msra.mxu0 %v571
    %621 = vmatprep.subr.mxu0 %v576
    %622 = vmatpush1.msra.mxu0 %v575
    %623 = vmatprep.subr.mxu0 %v580
    %624 = vmatpush1.msra.mxu0 %v579
    %625 = vmatprep.subr.mxu0 %v584
    %626 = vmatpush1.msra.mxu0 %v583
    %627 = vmatprep.subr.mxu0 %v588
    %628 = vmatpush1.msra.mxu0 %v587
    %629 = vmatprep.subr.mxu0 %v592
    %630 = vmatpush1.msra.mxu0 %v591
    %631 = vmatprep.subr.mxu0 0.0
    %632 = vmatpush1.msra.mxu0 0.0
    %633 = vmatprep.subr.mxu0 0.0
    %634 = vmatpush1.msra.mxu0 0.0
    %635 = vmatprep.subr.mxu0 0.0
    %636 = vmatpush1.msra.mxu0 0.0
    %637 = vmatprep.subr.mxu0 0.0
    %638 = vmatpush1.msra.mxu0 0.0
    %639 = vmatprep.subr.mxu0 0.0
    %640 = vmatpush1.msra.mxu0 0.0
    %641 = vmatprep.subr.mxu0 0.0
    %642 = vmatpush1.msra.mxu0 0.0
    %643 = vmatprep.subr.mxu0 0.0
    %644 = vmatpush1.msra.mxu0 0.0
    %645 = vmatprep.subr.mxu0 0.0
    %646 = vmatpush1.msra.mxu0 0.0
    %647 = vmatprep.subr.mxu0 0.0
    %648 = vmatpush1.msra.mxu0 0.0
    %649 = vmatprep.subr.mxu0 0.0
    %650 = vmatpush1.msra.mxu0 0.0
    %651 = vmatprep.subr.mxu0 0.0
    %652 = vmatpush1.msra.mxu0 0.0
    %653 = vmatprep.subr.mxu0 0.0
    %654 = vmatpush1.msra.mxu0 0.0
    %655 = vmatprep.subr.mxu0 0.0
    %656 = vmatpush1.msra.mxu0 0.0
    %657 = vmatprep.subr.mxu0 0.0
    %658 = vmatpush1.msra.mxu0 0.0
    %659 = vmatprep.subr.mxu0 0.0
    %660 = vmatpush1.msra.mxu0 0.0
    %661 = vmatprep.subr.mxu0 0.0
    %662 = vmatpush1.msra.mxu0 0.0
    %663 = vmatprep.mubr.f32.mxu0 0.0
    %664 = vmatmul.mubr.f32.gmra.mrb[0].mxu0 0.0
    %v665 = vpop.f32.mrb[0].mxu0
    %v666 = vadd.f32 0.0, %v665
    %v667 = vpop.f32.mrb[0].mxu0
    %v668 = vadd.f32 0.0, %v667
    %669 = vdwg.mxu0
    %670 = vmatprep.subr.mxu0 %v534
    %671 = vmatpush1.msra.mxu0 %v533
    %672 = vmatprep.subr.mxu0 %v538
    %673 = vmatpush1.msra.mxu0 %v537
    %674 = vmatprep.subr.mxu0 %v542
    %675 = vmatpush1.msra.mxu0 %v541
    %676 = vmatprep.subr.mxu0 %v546
    %677 = vmatpush1.msra.mxu0 %v545
    %678 = vmatprep.subr.mxu0 %v550
    %679 = vmatpush1.msra.mxu0 %v549
    %680 = vmatprep.subr.mxu0 %v554
    %681 = vmatpush1.msra.mxu0 %v553
    %682 = vmatprep.subr.mxu0 %v558
    %683 = vmatpush1.msra.mxu0 %v557
    %684 = vmatprep.subr.mxu0 %v562
    %685 = vmatpush1.msra.mxu0 %v561
    %686 = vmatprep.subr.mxu0 %v566
    %687 = vmatpush1.msra.mxu0 %v565
    %688 = vmatprep.subr.mxu0 %v570
    %689 = vmatpush1.msra.mxu0 %v569
    %690 = vmatprep.subr.mxu0 %v574
    %691 = vmatpush1.msra.mxu0 %v573
    %692 = vmatprep.subr.mxu0 %v578
    %693 = vmatpush1.msra.mxu0 %v577
    %694 = vmatprep.subr.mxu0 %v582
    %695 = vmatpush1.msra.mxu0 %v581
    %696 = vmatprep.subr.mxu0 %v586
    %697 = vmatpush1.msra.mxu0 %v585
    %698 = vmatprep.subr.mxu0 %v590
    %699 = vmatpush1.msra.mxu0 %v589
    %700 = vmatprep.subr.mxu0 %v594
    %701 = vmatpush1.msra.mxu0 %v593
    %702 = vmatprep.subr.mxu0 0.0
    %703 = vmatpush1.msra.mxu0 0.0
    %704 = vmatprep.subr.mxu0 0.0
    %705 = vmatpush1.msra.mxu0 0.0
    %706 = vmatprep.subr.mxu0 0.0
    %707 = vmatpush1.msra.mxu0 0.0
    %708 = vmatprep.subr.mxu0 0.0
    %709 = vmatpush1.msra.mxu0 0.0
    %710 = vmatprep.subr.mxu0 0.0
    %711 = vmatpush1.msra.mxu0 0.0
    %712 = vmatprep.subr.mxu0 0.0
    %713 = vmatpush1.msra.mxu0 0.0
    %714 = vmatprep.subr.mxu0 0.0
    %715 = vmatpush1.msra.mxu0 0.0
    %716 = vmatprep.subr.mxu0 0.0
    %717 = vmatpush1.msra.mxu0 0.0
    %718 = vmatprep.subr.mxu0 0.0
    %719 = vmatpush1.msra.mxu0 0.0
    %720 = vmatprep.subr.mxu0 0.0
    %721 = vmatpush1.msra.mxu0 0.0
    %722 = vmatprep.subr.mxu0 0.0
    %723 = vmatpush1.msra.mxu0 0.0
    %724 = vmatprep.subr.mxu0 0.0
    %725 = vmatpush1.msra.mxu0 0.0
    %726 = vmatprep.subr.mxu0 0.0
    %727 = vmatpush1.msra.mxu0 0.0
    %728 = vmatprep.subr.mxu0 0.0
    %729 = vmatpush1.msra.mxu0 0.0
    %730 = vmatprep.subr.mxu0 0.0
    %731 = vmatpush1.msra.mxu0 0.0
    %732 = vmatprep.subr.mxu0 0.0
    %733 = vmatpush1.msra.mxu0 0.0
    %734 = vmatprep.mubr.f32.mxu0 0.0
    %735 = vmatmul.mubr.f32.gmra.mrb[0].mxu0 0.0
    %v736 = vpop.f32.mrb[0].mxu0
    %v737 = vadd.f32 0.0, %v736
    %v738 = vpop.f32.mrb[0].mxu0
    %v739 = vadd.f32 0.0, %v738
    %740 = vdwg.mxu0
    %v741 = vadd.f32 %v595, %v666
    %v742 = vadd.f32 %v596, %v668
    %v743 = vadd.f32 %v597, %v737
    %v744 = vadd.f32 %v598, %v739
    %v745 = vxor.u32 %v741, 2147483648
    %v746 = vmul.f32 %v745, 1.442695
    %v747 = vpow.pop %v746
    %v748 = vadd.f32 %v747, 1.0
    %v749 = vrcp.pop %v748
    %v750 = vmul.f32 1.0, %v749
    %v751 = vxor.u32 %v742, 2147483648
    %v752 = vmul.f32 %v751, 1.442695
    %v753 = vpow.pop %v752
    %v754 = vadd.f32 %v753, 1.0
    %v755 = vrcp.pop %v754
    %v756 = vmul.f32 1.0, %v755
    %v757 = vtanh.pop %v743
    %v758 = vxor.u32 %v744, 2147483648
    %v759 = vmul.f32 %v758, 1.442695
    %v760 = vpow.pop %v759
    %v761 = vadd.f32 %v760, 1.0
    %v762 = vrcp.pop %v761
    %v763 = vmul.f32 1.0, %v762
    %v764 = vmul.f32 %v756, 0.0
    %v765 = vmul.f32 %v750, %v757
    %v766 = vadd.f32 %v764, %v765
    %v767 = vtanh.pop %v766
    %v768 = vmul.f32 %v763, %v767
    %769 = vst [vmem:[#allocation3] sm:$0xff] %v768
    %s770 = scalar_lea.vmem [#allocation2], 32
    %v771 = vld [vmem:[%s770] sm:$0xff]
    %v772 = vld [vmem:[%s770 + $0x8] sm:$0xff]
    %v773 = vld [vmem:[%s770 + $0x10] sm:$0xff]
    %v774 = vld [vmem:[%s770 + $0x18] sm:$0xff]
    %775 = vmatprep.subr.mxu0 %v532
    %776 = vmatpush1.msra.mxu0 %v531
    %777 = vmatprep.subr.mxu0 %v536
    %778 = vmatpush1.msra.mxu0 %v535
    %779 = vmatprep.subr.mxu0 %v540
    %780 = vmatpush1.msra.mxu0 %v539
    %781 = vmatprep.subr.mxu0 %v544
    %782 = vmatpush1.msra.mxu0 %v543
    %783 = vmatprep.subr.mxu0 %v548
    %784 = vmatpush1.msra.mxu0 %v547
    %785 = vmatprep.subr.mxu0 %v552
    %786 = vmatpush1.msra.mxu0 %v551
    %787 = vmatprep.subr.mxu0 %v556
    %788 = vmatpush1.msra.mxu0 %v555
    %789 = vmatprep.subr.mxu0 %v560
    %790 = vmatpush1.msra.mxu0 %v559
    %791 = vmatprep.subr.mxu0 %v564
    %792 = vmatpush1.msra.mxu0 %v563
    %793 = vmatprep.subr.mxu0 %v568
    %794 = vmatpush1.msra.mxu0 %v567
    %795 = vmatprep.subr.mxu0 %v572
    %796 = vmatpush1.msra.mxu0 %v571
    %797 = vmatprep.subr.mxu0 %v576
    %798 = vmatpush1.msra.mxu0 %v575
    %799 = vmatprep.subr.mxu0 %v580
    %800 = vmatpush1.msra.mxu0 %v579
    %801 = vmatprep.subr.mxu0 %v584
    %802 = vmatpush1.msra.mxu0 %v583
    %803 = vmatprep.subr.mxu0 %v588
    %804 = vmatpush1.msra.mxu0 %v587
    %805 = vmatprep.subr.mxu0 %v592
    %806 = vmatpush1.msra.mxu0 %v591
    %807 = vmatprep.subr.mxu0 0.0
    %808 = vmatpush1.msra.mxu0 0.0
    %809 = vmatprep.subr.mxu0 0.0
    %810 = vmatpush1.msra.mxu0 0.0
    %811 = vmatprep.subr.mxu0 0.0
    %812 = vmatpush1.msra.mxu0 0.0
    %813 = vmatprep.subr.mxu0 0.0
    %814 = vmatpush1.msra.mxu0 0.0
    %815 = vmatprep.subr.mxu0 0.0
    %816 = vmatpush1.msra.mxu0 0.0
    %817 = vmatprep.subr.mxu0 0.0
    %818 = vmatpush1.msra.mxu0 0.0
    %819 = vmatprep.subr.mxu0 0.0
    %820 = vmatpush1.msra.mxu0 0.0
    %821 = vmatprep.subr.mxu0 0.0
    %822 = vmatpush1.msra.mxu0 0.0
    %823 = vmatprep.subr.mxu0 0.0
    %824 = vmatpush1.msra.mxu0 0.0
    %825 = vmatprep.subr.mxu0 0.0
    %826 = vmatpush1.msra.mxu0 0.0
    %827 = vmatprep.subr.mxu0 0.0
    %828 = vmatpush1.msra.mxu0 0.0
    %829 = vmatprep.subr.mxu0 0.0
    %830 = vmatpush1.msra.mxu0 0.0
    %831 = vmatprep.subr.mxu0 0.0
    %832 = vmatpush1.msra.mxu0 0.0
    %833 = vmatprep.subr.mxu0 0.0
    %834 = vmatpush1.msra.mxu0 0.0
    %835 = vmatprep.subr.mxu0 0.0
    %836 = vmatpush1.msra.mxu0 0.0
    %837 = vmatprep.subr.mxu0 0.0
    %838 = vmatpush1.msra.mxu0 0.0
    %839 = vmatprep.mubr.f32.mxu0 0.0
    %840 = vmatmul.mubr.f32.gmra.mrb[0].mxu0 %v768
    %v841 = vpop.f32.mrb[0].mxu0
    %v842 = vadd.f32 0.0, %v841
    %v843 = vpop.f32.mrb[0].mxu0
    %v844 = vadd.f32 0.0, %v843
    %845 = vdwg.mxu0
    %846 = vmatprep.subr.mxu0 %v534
    %847 = vmatpush1.msra.mxu0 %v533
    %848 = vmatprep.subr.mxu0 %v538
    %849 = vmatpush1.msra.mxu0 %v537
    %850 = vmatprep.subr.mxu0 %v542
    %851 = vmatpush1.msra.mxu0 %v541
    %852 = vmatprep.subr.mxu0 %v546
    %853 = vmatpush1.msra.mxu0 %v545
    %854 = vmatprep.subr.mxu0 %v550
    %855 = vmatpush1.msra.mxu0 %v549
    %856 = vmatprep.subr.mxu0 %v554
    %857 = vmatpush1.msra.mxu0 %v553
    %858 = vmatprep.subr.mxu0 %v558
    %859 = vmatpush1.msra.mxu0 %v557
    %860 = vmatprep.subr.mxu0 %v562
    %861 = vmatpush1.msra.mxu0 %v561
    %862 = vmatprep.subr.mxu0 %v566
    %863 = vmatpush1.msra.mxu0 %v565
    %864 = vmatprep.subr.mxu0 %v570
    %865 = vmatpush1.msra.mxu0 %v569
    %866 = vmatprep.subr.mxu0 %v574
    %867 = vmatpush1.msra.mxu0 %v573
    %868 = vmatprep.subr.mxu0 %v578
    %869 = vmatpush1.msra.mxu0 %v577
    %870 = vmatprep.subr.mxu0 %v582
    %871 = vmatpush1.msra.mxu0 %v581
    %872 = vmatprep.subr.mxu0 %v586
    %873 = vmatpush1.msra.mxu0 %v585
    %874 = vmatprep.subr.mxu0 %v590
    %875 = vmatpush1.msra.mxu0 %v589
    %876 = vmatprep.subr.mxu0 %v594
    %877 = vmatpush1.msra.mxu0 %v593
    %878 = vmatprep.subr.mxu0 0.0
    %879 = vmatpush1.msra.mxu0 0.0
    %880 = vmatprep.subr.mxu0 0.0
    %881 = vmatpush1.msra.mxu0 0.0
    %882 = vmatprep.subr.mxu0 0.0
    %883 = vmatpush1.msra.mxu0 0.0
    %884 = vmatprep.subr.mxu0 0.0
    %885 = vmatpush1.msra.mxu0 0.0
    %886 = vmatprep.subr.mxu0 0.0
    %887 = vmatpush1.msra.mxu0 0.0
    %888 = vmatprep.subr.mxu0 0.0
    %889 = vmatpush1.msra.mxu0 0.0
    %890 = vmatprep.subr.mxu0 0.0
    %891 = vmatpush1.msra.mxu0 0.0
    %892 = vmatprep.subr.mxu0 0.0
    %893 = vmatpush1.msra.mxu0 0.0
    %894 = vmatprep.subr.mxu0 0.0
    %895 = vmatpush1.msra.mxu0 0.0
    %896 = vmatprep.subr.mxu0 0.0
    %897 = vmatpush1.msra.mxu0 0.0
    %898 = vmatprep.subr.mxu0 0.0
    %899 = vmatpush1.msra.mxu0 0.0
    %900 = vmatprep.subr.mxu0 0.0
    %901 = vmatpush1.msra.mxu0 0.0
    %902 = vmatprep.subr.mxu0 0.0
    %903 = vmatpush1.msra.mxu0 0.0
    %904 = vmatprep.subr.mxu0 0.0
    %905 = vmatpush1.msra.mxu0 0.0
    %906 = vmatprep.subr.mxu0 0.0
    %907 = vmatpush1.msra.mxu0 0.0
    %908 = vmatprep.subr.mxu0 0.0
    %909 = vmatpush1.msra.mxu0 0.0
    %910 = vmatprep.mubr.f32.mxu0 0.0
    %911 = vmatmul.mubr.f32.gmra.mrb[0].mxu0 %v768
    %v912 = vpop.f32.mrb[0].mxu0
    %v913 = vadd.f32 0.0, %v912
    %v914 = vpop.f32.mrb[0].mxu0
    %v915 = vadd.f32 0.0, %v914
    %916 = vdwg.mxu0
    %v917 = vadd.f32 %v771, %v842
    %v918 = vadd.f32 %v772, %v844
    %v919 = vadd.f32 %v773, %v913
    %v920 = vadd.f32 %v774, %v915
    %v921 = vxor.u32 %v917, 2147483648
    %v922 = vmul.f32 %v921, 1.442695
    %v923 = vpow.pop %v922
    %v924 = vadd.f32 %v923, 1.0
    %v925 = vrcp.pop %v924
    %v926 = vmul.f32 1.0, %v925
    %v927 = vxor.u32 %v918, 2147483648
    %v928 = vmul.f32 %v927, 1.442695
    %v929 = vpow.pop %v928
    %v930 = vadd.f32 %v929, 1.0
    %v931 = vrcp.pop %v930
    %v932 = vmul.f32 1.0, %v931
    %v933 = vtanh.pop %v919
    %v934 = vxor.u32 %v920, 2147483648
    %v935 = vmul.f32 %v934, 1.442695
    %v936 = vpow.pop %v935
    %v937 = vadd.f32 %v936, 1.0
    %v938 = vrcp.pop %v937
    %v939 = vmul.f32 1.0, %v938
    %v940 = vmul.f32 %v932, %v766
    %v941 = vmul.f32 %v926, %v933
    %v942 = vadd.f32 %v940, %v941
    %v943 = vtanh.pop %v942
    %v944 = vmul.f32 %v939, %v943
    %s945 = scalar_lea.vmem [#allocation3], 8
    %946 = vst [vmem:[%s945] sm:$0xff] %v944
    %s947 = scalar_lea.vmem [#allocation2], 64
    %v948 = vld [vmem:[%s947] sm:$0xff]
    %v949 = vld [vmem:[%s947 + $0x8] sm:$0xff]
    %v950 = vld [vmem:[%s947 + $0x10] sm:$0xff]
    %v951 = vld [vmem:[%s947 + $0x18] sm:$0xff]
    %952 = vmatprep.subr.mxu0 %v532
    %953 = vmatpush1.msra.mxu0 %v531
    %954 = vmatprep.subr.mxu0 %v536
    %955 = vmatpush1.msra.mxu0 %v535
    %956 = vmatprep.subr.mxu0 %v540
    %957 = vmatpush1.msra.mxu0 %v539
    %958 = vmatprep.subr.mxu0 %v544
    %959 = vmatpush1.msra.mxu0 %v543
    %960 = vmatprep.subr.mxu0 %v548
    %961 = vmatpush1.msra.mxu0 %v547
    %962 = vmatprep.subr.mxu0 %v552
    %963 = vmatpush1.msra.mxu0 %v551
    %964 = vmatprep.subr.mxu0 %v556
    %965 = vmatpush1.msra.mxu0 %v555
    %966 = vmatprep.subr.mxu0 %v560
    %967 = vmatpush1.msra.mxu0 %v559
    %968 = vmatprep.subr.mxu0 %v564
    %969 = vmatpush1.msra.mxu0 %v563
    %970 = vmatprep.subr.mxu0 %v568
    %971 = vmatpush1.msra.mxu0 %v567
    %972 = vmatprep.subr.mxu0 %v572
    %973 = vmatpush1.msra.mxu0 %v571
    %974 = vmatprep.subr.mxu0 %v576
    %975 = vmatpush1.msra.mxu0 %v575
    %976 = vmatprep.subr.mxu0 %v580
    %977 = vmatpush1.msra.mxu0 %v579
    %978 = vmatprep.subr.mxu0 %v584
    %979 = vmatpush1.msra.mxu0 %v583
    %980 = vmatprep.subr.mxu0 %v588
    %981 = vmatpush1.msra.mxu0 %v587
    %982 = vmatprep.subr.mxu0 %v592
    %983 = vmatpush1.msra.mxu0 %v591
    %984 = vmatprep.subr.mxu0 0.0
    %985 = vmatpush1.msra.mxu0 0.0
    %986 = vmatprep.subr.mxu0 0.0
    %987 = vmatpush1.msra.mxu0 0.0
    %988 = vmatprep.subr.mxu0 0.0
    %989 = vmatpush1.msra.mxu0 0.0
    %990 = vmatprep.subr.mxu0 0.0
    %991 = vmatpush1.msra.mxu0 0.0
    %992 = vmatprep.subr.mxu0 0.0
    %993 = vmatpush1.msra.mxu0 0.0
    %994 = vmatprep.subr.mxu0 0.0
    %995 = vmatpush1.msra.mxu0 0.0
    %996 = vmatprep.subr.mxu0 0.0
    %997 = vmatpush1.msra.mxu0 0.0
    %998 = vmatprep.subr.mxu0 0.0
    %999 = vmatpush1.msra.mxu0 0.0
    %1000 = vmatprep.subr.mxu0 0.0
    %1001 = vmatpush1.msra.mxu0 0.0
    %1002 = vmatprep.subr.mxu0 0.0
    %1003 = vmatpush1.msra.mxu0 0.0
    %1004 = vmatprep.subr.mxu0 0.0
    %1005 = vmatpush1.msra.mxu0 0.0
    %1006 = vmatprep.subr.mxu0 0.0
    %1007 = vmatpush1.msra.mxu0 0.0
    %1008 = vmatprep.subr.mxu0 0.0
    %1009 = vmatpush1.msra.mxu0 0.0
    %1010 = vmatprep.subr.mxu0 0.0
    %1011 = vmatpush1.msra.mxu0 0.0
    %1012 = vmatprep.subr.mxu0 0.0
    %1013 = vmatpush1.msra.mxu0 0.0
    %1014 = vmatprep.subr.mxu0 0.0
    %1015 = vmatpush1.msra.mxu0 0.0
    %1016 = vmatprep.mubr.f32.mxu0 0.0
    %1017 = vmatmul.mubr.f32.gmra.mrb[0].mxu0 %v944
    %v1018 = vpop.f32.mrb[0].mxu0
    %v1019 = vadd.f32 0.0, %v1018
    %v1020 = vpop.f32.mrb[0].mxu0
    %v1021 = vadd.f32 0.0, %v1020
    %1022 = vdwg.mxu0
    %1023 = vmatprep.subr.mxu0 %v534
    %1024 = vmatpush1.msra.mxu0 %v533
    %1025 = vmatprep.subr.mxu0 %v538
    %1026 = vmatpush1.msra.mxu0 %v537
    %1027 = vmatprep.subr.mxu0 %v542
    %1028 = vmatpush1.msra.mxu0 %v541
    %1029 = vmatprep.subr.mxu0 %v546
    %1030 = vmatpush1.msra.mxu0 %v545
    %1031 = vmatprep.subr.mxu0 %v550
    %1032 = vmatpush1.msra.mxu0 %v549
    %1033 = vmatprep.subr.mxu0 %v554
    %1034 = vmatpush1.msra.mxu0 %v553
    %1035 = vmatprep.subr.mxu0 %v558
    %1036 = vmatpush1.msra.mxu0 %v557
    %1037 = vmatprep.subr.mxu0 %v562
    %1038 = vmatpush1.msra.mxu0 %v561
    %1039 = vmatprep.subr.mxu0 %v566
    %1040 = vmatpush1.msra.mxu0 %v565
    %1041 = vmatprep.subr.mxu0 %v570
    %1042 = vmatpush1.msra.mxu0 %v569
    %1043 = vmatprep.subr.mxu0 %v574
    %1044 = vmatpush1.msra.mxu0 %v573
    %1045 = vmatprep.subr.mxu0 %v578
    %1046 = vmatpush1.msra.mxu0 %v577
    %1047 = vmatprep.subr.mxu0 %v582
    %1048 = vmatpush1.msra.mxu0 %v581
    %1049 = vmatprep.subr.mxu0 %v586
    %1050 = vmatpush1.msra.mxu0 %v585
    %1051 = vmatprep.subr.mxu0 %v590
    %1052 = vmatpush1.msra.mxu0 %v589
    %1053 = vmatprep.subr.mxu0 %v594
    %1054 = vmatpush1.msra.mxu0 %v593
    %1055 = vmatprep.subr.mxu0 0.0
    %1056 = vmatpush1.msra.mxu0 0.0
    %1057 = vmatprep.subr.mxu0 0.0
    %1058 = vmatpush1.msra.mxu0 0.0
    %1059 = vmatprep.subr.mxu0 0.0
    %1060 = vmatpush1.msra.mxu0 0.0
    %1061 = vmatprep.subr.mxu0 0.0
    %1062 = vmatpush1.msra.mxu0 0.0
    %1063 = vmatprep.subr.mxu0 0.0
    %1064 = vmatpush1.msra.mxu0 0.0
    %1065 = vmatprep.subr.mxu0 0.0
    %1066 = vmatpush1.msra.mxu0 0.0
    %1067 = vmatprep.subr.mxu0 0.0
    %1068 = vmatpush1.msra.mxu0 0.0
    %1069 = vmatprep.subr.mxu0 0.0
    %1070 = vmatpush1.msra.mxu0 0.0
    %1071 = vmatprep.subr.mxu0 0.0
    %1072 = vmatpush1.msra.mxu0 0.0
    %1073 = vmatprep.subr.mxu0 0.0
    %1074 = vmatpush1.msra.mxu0 0.0
    %1075 = vmatprep.subr.mxu0 0.0
    %1076 = vmatpush1.msra.mxu0 0.0
    %1077 = vmatprep.subr.mxu0 0.0
    %1078 = vmatpush1.msra.mxu0 0.0
    %1079 = vmatprep.subr.mxu0 0.0
    %1080 = vmatpush1.msra.mxu0 0.0
    %1081 = vmatprep.subr.mxu0 0.0
    %1082 = vmatpush1.msra.mxu0 0.0
    %1083 = vmatprep.subr.mxu0 0.0
    %1084 = vmatpush1.msra.mxu0 0.0
    %1085 = vmatprep.subr.mxu0 0.0
    %1086 = vmatpush1.msra.mxu0 0.0
    %1087 = vmatprep.mubr.f32.mxu0 0.0
    %1088 = vmatmul.mubr.f32.gmra.mrb[0].mxu0 %v944
    %v1089 = vpop.f32.mrb[0].mxu0
    %v1090 = vadd.f32 0.0, %v1089
    %v1091 = vpop.f32.mrb[0].mxu0
    %v1092 = vadd.f32 0.0, %v1091
    %1093 = vdwg.mxu0
    %v1094 = vadd.f32 %v948, %v1019
    %v1095 = vadd.f32 %v949, %v1021
    %v1096 = vadd.f32 %v950, %v1090
    %v1097 = vadd.f32 %v951, %v1092
    %v1098 = vxor.u32 %v1094, 2147483648
    %v1099 = vmul.f32 %v1098, 1.442695
    %v1100 = vpow.pop %v1099
    %v1101 = vadd.f32 %v1100, 1.0
    %v1102 = vrcp.pop %v1101
    %v1103 = vmul.f32 1.0, %v1102
    %v1104 = vxor.u32 %v1095, 2147483648
    %v1105 = vmul.f32 %v1104, 1.442695
    %v1106 = vpow.pop %v1105
    %v1107 = vadd.f32 %v1106, 1.0
    %v1108 = vrcp.pop %v1107
    %v1109 = vmul.f32 1.0, %v1108
    %v1110 = vtanh.pop %v1096
    %v1111 = vxor.u32 %v1097, 2147483648
    %v1112 = vmul.f32 %v1111, 1.442695
    %v1113 = vpow.pop %v1112
    %v1114 = vadd.f32 %v1113, 1.0
    %v1115 = vrcp.pop %v1114
    %v1116 = vmul.f32 1.0, %v1115
    %v1117 = vmul.f32 %v1109, %v942
    %v1118 = vmul.f32 %v1103, %v1110
    %v1119 = vadd.f32 %v1117, %v1118
    %v1120 = vtanh.pop %v1119
    %v1121 = vmul.f32 %v1116, %v1120
    %s1122 = scalar_lea.vmem [#allocation3], 16
    %1123 = vst [vmem:[%s1122] sm:$0xff] %v1121
    %s1124 = scalar_lea.vmem [#allocation2], 96
    %v1125 = vld [vmem:[%s1124] sm:$0xff]
    %v1126 = vld [vmem:[%s1124 + $0x8] sm:$0xff]
    %v1127 = vld [vmem:[%s1124 + $0x10] sm:$0xff]
    %v1128 = vld [vmem:[%s1124 + $0x18] sm:$0xff]
    %1129 = vmatprep.subr.mxu0 %v532
    %1130 = vmatpush1.msra.mxu0 %v531
    %1131 = vmatprep.subr.mxu0 %v536
    %1132 = vmatpush1.msra.mxu0 %v535
    %1133 = vmatprep.subr.mxu0 %v540
    %1134 = vmatpush1.msra.mxu0 %v539
    %1135 = vmatprep.subr.mxu0 %v544
    %1136 = vmatpush1.msra.mxu0 %v543
    %1137 = vmatprep.subr.mxu0 %v548
    %1138 = vmatpush1.msra.mxu0 %v547
    %1139 = vmatprep.subr.mxu0 %v552
    %1140 = vmatpush1.msra.mxu0 %v551
    %1141 = vmatprep.subr.mxu0 %v556
    %1142 = vmatpush1.msra.mxu0 %v555
    %1143 = vmatprep.subr.mxu0 %v560
    %1144 = vmatpush1.msra.mxu0 %v559
    %1145 = vmatprep.subr.mxu0 %v564
    %1146 = vmatpush1.msra.mxu0 %v563
    %1147 = vmatprep.subr.mxu0 %v568
    %1148 = vmatpush1.msra.mxu0 %v567
    %1149 = vmatprep.subr.mxu0 %v572
    %1150 = vmatpush1.msra.mxu0 %v571
    %1151 = vmatprep.subr.mxu0 %v576
    %1152 = vmatpush1.msra.mxu0 %v575
    %1153 = vmatprep.subr.mxu0 %v580
    %1154 = vmatpush1.msra.mxu0 %v579
    %1155 = vmatprep.subr.mxu0 %v584
    %1156 = vmatpush1.msra.mxu0 %v583
    %1157 = vmatprep.subr.mxu0 %v588
    %1158 = vmatpush1.msra.mxu0 %v587
    %1159 = vmatprep.subr.mxu0 %v592
    %1160 = vmatpush1.msra.mxu0 %v591
    %1161 = vmatprep.subr.mxu0 0.0
    %1162 = vmatpush1.msra.mxu0 0.0
    %1163 = vmatprep.subr.mxu0 0.0
    %1164 = vmatpush1.msra.mxu0 0.0
    %1165 = vmatprep.subr.mxu0 0.0
    %1166 = vmatpush1.msra.mxu0 0.0
    %1167 = vmatprep.subr.mxu0 0.0
    %1168 = vmatpush1.msra.mxu0 0.0
    %1169 = vmatprep.subr.mxu0 0.0
    %1170 = vmatpush1.msra.mxu0 0.0
    %1171 = vmatprep.subr.mxu0 0.0
    %1172 = vmatpush1.msra.mxu0 0.0
    %1173 = vmatprep.subr.mxu0 0.0
    %1174 = vmatpush1.msra.mxu0 0.0
    %1175 = vmatprep.subr.mxu0 0.0
    %1176 = vmatpush1.msra.mxu0 0.0
    %1177 = vmatprep.subr.mxu0 0.0
    %1178 = vmatpush1.msra.mxu0 0.0
    %1179 = vmatprep.subr.mxu0 0.0
    %1180 = vmatpush1.msra.mxu0 0.0
    %1181 = vmatprep.subr.mxu0 0.0
    %1182 = vmatpush1.msra.mxu0 0.0
    %1183 = vmatprep.subr.mxu0 0.0
    %1184 = vmatpush1.msra.mxu0 0.0
    %1185 = vmatprep.subr.mxu0 0.0
    %1186 = vmatpush1.msra.mxu0 0.0
    %1187 = vmatprep.subr.mxu0 0.0
    %1188 = vmatpush1.msra.mxu0 0.0
    %1189 = vmatprep.subr.mxu0 0.0
    %1190 = vmatpush1.msra.mxu0 0.0
    %1191 = vmatprep.subr.mxu0 0.0
    %1192 = vmatpush1.msra.mxu0 0.0
    %1193 = vmatprep.mubr.f32.mxu0 0.0
    %1194 = vmatmul.mubr.f32.gmra.mrb[0].mxu0 %v1121
    %v1195 = vpop.f32.mrb[0].mxu0
    %v1196 = vadd.f32 0.0, %v1195
    %v1197 = vpop.f32.mrb[0].mxu0
    %v1198 = vadd.f32 0.0, %v1197
    %1199 = vdwg.mxu0
    %1200 = vmatprep.subr.mxu0 %v534
    %1201 = vmatpush1.msra.mxu0 %v533
    %1202 = vmatprep.subr.mxu0 %v538
    %1203 = vmatpush1.msra.mxu0 %v537
    %1204 = vmatprep.subr.mxu0 %v542
    %1205 = vmatpush1.msra.mxu0 %v541
    %1206 = vmatprep.subr.mxu0 %v546
    %1207 = vmatpush1.msra.mxu0 %v545
    %1208 = vmatprep.subr.mxu0 %v550
    %1209 = vmatpush1.msra.mxu0 %v549
    %1210 = vmatprep.subr.mxu0 %v554
    %1211 = vmatpush1.msra.mxu0 %v553
    %1212 = vmatprep.subr.mxu0 %v558
    %1213 = vmatpush1.msra.mxu0 %v557
    %1214 = vmatprep.subr.mxu0 %v562
    %1215 = vmatpush1.msra.mxu0 %v561
    %1216 = vmatprep.subr.mxu0 %v566
    %1217 = vmatpush1.msra.mxu0 %v565
    %1218 = vmatprep.subr.mxu0 %v570
    %1219 = vmatpush1.msra.mxu0 %v569
    %1220 = vmatprep.subr.mxu0 %v574
    %1221 = vmatpush1.msra.mxu0 %v573
    %1222 = vmatprep.subr.mxu0 %v578
    %1223 = vmatpush1.msra.mxu0 %v577
    %1224 = vmatprep.subr.mxu0 %v582
    %1225 = vmatpush1.msra.mxu0 %v581
    %1226 = vmatprep.subr.mxu0 %v586
    %1227 = vmatpush1.msra.mxu0 %v585
    %1228 = vmatprep.subr.mxu0 %v590
    %1229 = vmatpush1.msra.mxu0 %v589
    %1230 = vmatprep.subr.mxu0 %v594
    %1231 = vmatpush1.msra.mxu0 %v593
    %1232 = vmatprep.subr.mxu0 0.0
    %1233 = vmatpush1.msra.mxu0 0.0
    %1234 = vmatprep.subr.mxu0 0.0
    %1235 = vmatpush1.msra.mxu0 0.0
    %1236 = vmatprep.subr.mxu0 0.0
    %1237 = vmatpush1.msra.mxu0 0.0
    %1238 = vmatprep.subr.mxu0 0.0
    %1239 = vmatpush1.msra.mxu0 0.0
    %1240 = vmatprep.subr.mxu0 0.0
    %1241 = vmatpush1.msra.mxu0 0.0
    %1242 = vmatprep.subr.mxu0 0.0
    %1243 = vmatpush1.msra.mxu0 0.0
    %1244 = vmatprep.subr.mxu0 0.0
    %1245 = vmatpush1.msra.mxu0 0.0
    %1246 = vmatprep.subr.mxu0 0.0
    %1247 = vmatpush1.msra.mxu0 0.0
    %1248 = vmatprep.subr.mxu0 0.0
    %1249 = vmatpush1.msra.mxu0 0.0
    %1250 = vmatprep.subr.mxu0 0.0
    %1251 = vmatpush1.msra.mxu0 0.0
    %1252 = vmatprep.subr.mxu0 0.0
    %1253 = vmatpush1.msra.mxu0 0.0
    %1254 = vmatprep.subr.mxu0 0.0
    %1255 = vmatpush1.msra.mxu0 0.0
    %1256 = vmatprep.subr.mxu0 0.0
    %1257 = vmatpush1.msra.mxu0 0.0
    %1258 = vmatprep.subr.mxu0 0.0
    %1259 = vmatpush1.msra.mxu0 0.0
    %1260 = vmatprep.subr.mxu0 0.0
    %1261 = vmatpush1.msra.mxu0 0.0
    %1262 = vmatprep.subr.mxu0 0.0
    %1263 = vmatpush1.msra.mxu0 0.0
    %1264 = vmatprep.mubr.f32.mxu0 0.0
    %1265 = vmatmul.mubr.f32.gmra.mrb[0].mxu0 %v1121
    %v1266 = vpop.f32.mrb[0].mxu0
    %v1267 = vadd.f32 0.0, %v1266
    %v1268 = vpop.f32.mrb[0].mxu0
    %v1269 = vadd.f32 0.0, %v1268
    %1270 = vdwg.mxu0
    %v1271 = vadd.f32 %v1125, %v1196
    %v1272 = vadd.f32 %v1126, %v1198
    %v1273 = vadd.f32 %v1127, %v1267
    %v1274 = vadd.f32 %v1128, %v1269
    %v1275 = vxor.u32 %v1271, 2147483648
    %v1276 = vmul.f32 %v1275, 1.442695
    %v1277 = vpow.pop %v1276
    %v1278 = vadd.f32 %v1277, 1.0
    %v1279 = vrcp.pop %v1278
    %v1280 = vmul.f32 1.0, %v1279
    %v1281 = vxor.u32 %v1272, 2147483648
    %v1282 = vmul.f32 %v1281, 1.442695
    %v1283 = vpow.pop %v1282
    %v1284 = vadd.f32 %v1283, 1.0
    %v1285 = vrcp.pop %v1284
    %v1286 = vmul.f32 1.0, %v1285
    %v1287 = vtanh.pop %v1273
    %v1288 = vxor.u32 %v1274, 2147483648
    %v1289 = vmul.f32 %v1288, 1.442695
    %v1290 = vpow.pop %v1289
    %v1291 = vadd.f32 %v1290, 1.0
    %v1292 = vrcp.pop %v1291
    %v1293 = vmul.f32 1.0, %v1292
    %v1294 = vmul.f32 %v1286, %v1119
    %v1295 = vmul.f32 %v1280, %v1287
    %v1296 = vadd.f32 %v1294, %v1295
    %v1297 = vtanh.pop %v1296
    %v1298 = vmul.f32 %v1293, %v1297
    %s1299 = scalar_lea.vmem [#allocation3], 24
    %1300 = vst [vmem:[%s1299] sm:$0xff] %v1298
    %s1301 = scalar_lea.vmem [#allocation2], 128
    %v1302 = vld [vmem:[%s1301] sm:$0xff]
    %v1303 = vld [vmem:[%s1301 + $0x8] sm:$0xff]
    %v1304 = vld [vmem:[%s1301 + $0x10] sm:$0xff]
    %v1305 = vld [vmem:[%s1301 + $0x18] sm:$0xff]
    %1306 = vmatprep.subr.mxu0 %v532
    %1307 = vmatpush1.msra.mxu0 %v531
    %1308 = vmatprep.subr.mxu0 %v536
    %1309 = vmatpush1.msra.mxu0 %v535
    %1310 = vmatprep.subr.mxu0 %v540
    %1311 = vmatpush1.msra.mxu0 %v539
    %1312 = vmatprep.subr.mxu0 %v544
    %1313 = vmatpush1.msra.mxu0 %v543
    %1314 = vmatprep.subr.mxu0 %v548
    %1315 = vmatpush1.msra.mxu0 %v547
    %1316 = vmatprep.subr.mxu0 %v552
    %1317 = vmatpush1.msra.mxu0 %v551
    %1318 = vmatprep.subr.mxu0 %v556
    %1319 = vmatpush1.msra.mxu0 %v555
    %1320 = vmatprep.subr.mxu0 %v560
    %1321 = vmatpush1.msra.mxu0 %v559
    %1322 = vmatprep.subr.mxu0 %v564
    %1323 = vmatpush1.msra.mxu0 %v563
    %1324 = vmatprep.subr.mxu0 %v568
    %1325 = vmatpush1.msra.mxu0 %v567
    %1326 = vmatprep.subr.mxu0 %v572
    %1327 = vmatpush1.msra.mxu0 %v571
    %1328 = vmatprep.subr.mxu0 %v576
    %1329 = vmatpush1.msra.mxu0 %v575
    %1330 = vmatprep.subr.mxu0 %v580
    %1331 = vmatpush1.msra.mxu0 %v579
    %1332 = vmatprep.subr.mxu0 %v584
    %1333 = vmatpush1.msra.mxu0 %v583
    %1334 = vmatprep.subr.mxu0 %v588
    %1335 = vmatpush1.msra.mxu0 %v587
    %1336 = vmatprep.subr.mxu0 %v592
    %1337 = vmatpush1.msra.mxu0 %v591
    %1338 = vmatprep.subr.mxu0 0.0
    %1339 = vmatpush1.msra.mxu0 0.0
    %1340 = vmatprep.subr.mxu0 0.0
    %1341 = vmatpush1.msra.mxu0 0.0
    %1342 = vmatprep.subr.mxu0 0.0
    %1343 = vmatpush1.msra.mxu0 0.0
    %1344 = vmatprep.subr.mxu0 0.0
    %1345 = vmatpush1.msra.mxu0 0.0
    %1346 = vmatprep.subr.mxu0 0.0
    %1347 = vmatpush1.msra.mxu0 0.0
    %1348 = vmatprep.subr.mxu0 0.0
    %1349 = vmatpush1.msra.mxu0 0.0
    %1350 = vmatprep.subr.mxu0 0.0
    %1351 = vmatpush1.msra.mxu0 0.0
    %1352 = vmatprep.subr.mxu0 0.0
    %1353 = vmatpush1.msra.mxu0 0.0
    %1354 = vmatprep.subr.mxu0 0.0
    %1355 = vmatpush1.msra.mxu0 0.0
    %1356 = vmatprep.subr.mxu0 0.0
    %1357 = vmatpush1.msra.mxu0 0.0
    %1358 = vmatprep.subr.mxu0 0.0
    %1359 = vmatpush1.msra.mxu0 0.0
    %1360 = vmatprep.subr.mxu0 0.0
    %1361 = vmatpush1.msra.mxu0 0.0
    %1362 = vmatprep.subr.mxu0 0.0
    %1363 = vmatpush1.msra.mxu0 0.0
    %1364 = vmatprep.subr.mxu0 0.0
    %1365 = vmatpush1.msra.mxu0 0.0
    %1366 = vmatprep.subr.mxu0 0.0
    %1367 = vmatpush1.msra.mxu0 0.0
    %1368 = vmatprep.subr.mxu0 0.0
    %1369 = vmatpush1.msra.mxu0 0.0
    %1370 = vmatprep.mubr.f32.mxu0 0.0
    %1371 = vmatmul.mubr.f32.gmra.mrb[0].mxu0 %v1298
    %v1372 = vpop.f32.mrb[0].mxu0
    %v1373 = vadd.f32 0.0, %v1372
    %v1374 = vpop.f32.mrb[0].mxu0
    %v1375 = vadd.f32 0.0, %v1374
    %1376 = vdwg.mxu0
    %1377 = vmatprep.subr.mxu0 %v534
    %1378 = vmatpush1.msra.mxu0 %v533
    %1379 = vmatprep.subr.mxu0 %v538
    %1380 = vmatpush1.msra.mxu0 %v537
    %1381 = vmatprep.subr.mxu0 %v542
    %1382 = vmatpush1.msra.mxu0 %v541
    %1383 = vmatprep.subr.mxu0 %v546
    %1384 = vmatpush1.msra.mxu0 %v545
    %1385 = vmatprep.subr.mxu0 %v550
    %1386 = vmatpush1.msra.mxu0 %v549
    %1387 = vmatprep.subr.mxu0 %v554
    %1388 = vmatpush1.msra.mxu0 %v553
    %1389 = vmatprep.subr.mxu0 %v558
    %1390 = vmatpush1.msra.mxu0 %v557
    %1391 = vmatprep.subr.mxu0 %v562
    %1392 = vmatpush1.msra.mxu0 %v561
    %1393 = vmatprep.subr.mxu0 %v566
    %1394 = vmatpush1.msra.mxu0 %v565
    %1395 = vmatprep.subr.mxu0 %v570
    %1396 = vmatpush1.msra.mxu0 %v569
    %1397 = vmatprep.subr.mxu0 %v574
    %1398 = vmatpush1.msra.mxu0 %v573
    %1399 = vmatprep.subr.mxu0 %v578
    %1400 = vmatpush1.msra.mxu0 %v577
    %1401 = vmatprep.subr.mxu0 %v582
    %1402 = vmatpush1.msra.mxu0 %v581
    %1403 = vmatprep.subr.mxu0 %v586
    %1404 = vmatpush1.msra.mxu0 %v585
    %1405 = vmatprep.subr.mxu0 %v590
    %1406 = vmatpush1.msra.mxu0 %v589
    %1407 = vmatprep.subr.mxu0 %v594
    %1408 = vmatpush1.msra.mxu0 %v593
    %1409 = vmatprep.subr.mxu0 0.0
    %1410 = vmatpush1.msra.mxu0 0.0
    %1411 = vmatprep.subr.mxu0 0.0
    %1412 = vmatpush1.msra.mxu0 0.0
    %1413 = vmatprep.subr.mxu0 0.0
    %1414 = vmatpush1.msra.mxu0 0.0
    %1415 = vmatprep.subr.mxu0 0.0
    %1416 = vmatpush1.msra.mxu0 0.0
    %1417 = vmatprep.subr.mxu0 0.0
    %1418 = vmatpush1.msra.mxu0 0.0
    %1419 = vmatprep.subr.mxu0 0.0
    %1420 = vmatpush1.msra.mxu0 0.0
    %1421 = vmatprep.subr.mxu0 0.0
    %1422 = vmatpush1.msra.mxu0 0.0
    %1423 = vmatprep.subr.mxu0 0.0
    %1424 = vmatpush1.msra.mxu0 0.0
    %1425 = vmatprep.subr.mxu0 0.0
    %1426 = vmatpush1.msra.mxu0 0.0
    %1427 = vmatprep.subr.mxu0 0.0
    %1428 = vmatpush1.msra.mxu0 0.0
    %1429 = vmatprep.subr.mxu0 0.0
    %1430 = vmatpush1.msra.mxu0 0.0
    %1431 = vmatprep.subr.mxu0 0.0
    %1432 = vmatpush1.msra.mxu0 0.0
    %1433 = vmatprep.subr.mxu0 0.0
    %1434 = vmatpush1.msra.mxu0 0.0
    %1435 = vmatprep.subr.mxu0 0.0
    %1436 = vmatpush1.msra.mxu0 0.0
    %1437 = vmatprep.subr.mxu0 0.0
    %1438 = vmatpush1.msra.mxu0 0.0
    %1439 = vmatprep.subr.mxu0 0.0
    %1440 = vmatpush1.msra.mxu0 0.0
    %1441 = vmatprep.mubr.f32.mxu0 0.0
    %1442 = vmatmul.mubr.f32.gmra.mrb[0].mxu0 %v1298
    %v1443 = vpop.f32.mrb[0].mxu0
    %v1444 = vadd.f32 0.0, %v1443
    %v1445 = vpop.f32.mrb[0].mxu0
    %v1446 = vadd.f32 0.0, %v1445
    %1447 = vdwg.mxu0
    %v1448 = vadd.f32 %v1302, %v1373
    %v1449 = vadd.f32 %v1303, %v1375
    %v1450 = vadd.f32 %v1304, %v1444
    %v1451 = vadd.f32 %v1305, %v1446
    %v1452 = vxor.u32 %v1448, 2147483648
    %v1453 = vmul.f32 %v1452, 1.442695
    %v1454 = vpow.pop %v1453
    %v1455 = vadd.f32 %v1454, 1.0
    %v1456 = vrcp.pop %v1455
    %v1457 = vmul.f32 1.0, %v1456
    %v1458 = vxor.u32 %v1449, 2147483648
    %v1459 = vmul.f32 %v1458, 1.442695
    %v1460 = vpow.pop %v1459
    %v1461 = vadd.f32 %v1460, 1.0
    %v1462 = vrcp.pop %v1461
    %v1463 = vmul.f32 1.0, %v1462
    %v1464 = vtanh.pop %v1450
    %v1465 = vxor.u32 %v1451, 2147483648
    %v1466 = vmul.f32 %v1465, 1.442695
    %v1467 = vpow.pop %v1466
    %v1468 = vadd.f32 %v1467, 1.0
    %v1469 = vrcp.pop %v1468
    %v1470 = vmul.f32 1.0, %v1469
    %v1471 = vmul.f32 %v1463, %v1296
    %v1472 = vmul.f32 %v1457, %v1464
    %v1473 = vadd.f32 %v1471, %v1472
    %v1474 = vtanh.pop %v1473
    %v1475 = vmul.f32 %v1470, %v1474
    %s1476 = scalar_lea.vmem [#allocation3], 32
    %1477 = vst [vmem:[%s1476] sm:$0xff] %v1475
    %s1478 = scalar_lea.vmem [#allocation2], 160
    %v1479 = vld [vmem:[%s1478] sm:$0xff]
    %v1480 = vld [vmem:[%s1478 + $0x8] sm:$0xff]
    %v1481 = vld [vmem:[%s1478 + $0x10] sm:$0xff]
    %v1482 = vld [vmem:[%s1478 + $0x18] sm:$0xff]
    %1483 = vmatprep.subr.mxu0 %v532
    %1484 = vmatpush1.msra.mxu0 %v531
    %1485 = vmatprep.subr.mxu0 %v536
    %1486 = vmatpush1.msra.mxu0 %v535
    %1487 = vmatprep.subr.mxu0 %v540
    %1488 = vmatpush1.msra.mxu0 %v539
    %1489 = vmatprep.subr.mxu0 %v544
    %1490 = vmatpush1.msra.mxu0 %v543
    %1491 = vmatprep.subr.mxu0 %v548
    %1492 = vmatpush1.msra.mxu0 %v547
    %1493 = vmatprep.subr.mxu0 %v552
    %1494 = vmatpush1.msra.mxu0 %v551
    %1495 = vmatprep.subr.mxu0 %v556
    %1496 = vmatpush1.msra.mxu0 %v555
    %1497 = vmatprep.subr.mxu0 %v560
    %1498 = vmatpush1.msra.mxu0 %v559
    %1499 = vmatprep.subr.mxu0 %v564
    %1500 = vmatpush1.msra.mxu0 %v563
    %1501 = vmatprep.subr.mxu0 %v568
    %1502 = vmatpush1.msra.mxu0 %v567
    %1503 = vmatprep.subr.mxu0 %v572
    %1504 = vmatpush1.msra.mxu0 %v571
    %1505 = vmatprep.subr.mxu0 %v576
    %1506 = vmatpush1.msra.mxu0 %v575
    %1507 = vmatprep.subr.mxu0 %v580
    %1508 = vmatpush1.msra.mxu0 %v579
    %1509 = vmatprep.subr.mxu0 %v584
    %1510 = vmatpush1.msra.mxu0 %v583
    %1511 = vmatprep.subr.mxu0 %v588
    %1512 = vmatpush1.msra.mxu0 %v587
    %1513 = vmatprep.subr.mxu0 %v592
    %1514 = vmatpush1.msra.mxu0 %v591
    %1515 = vmatprep.subr.mxu0 0.0
    %1516 = vmatpush1.msra.mxu0 0.0
    %1517 = vmatprep.subr.mxu0 0.0
    %1518 = vmatpush1.msra.mxu0 0.0
    %1519 = vmatprep.subr.mxu0 0.0
    %1520 = vmatpush1.msra.mxu0 0.0
    %1521 = vmatprep.subr.mxu0 0.0
    %1522 = vmatpush1.msra.mxu0 0.0
    %1523 = vmatprep.subr.mxu0 0.0
    %1524 = vmatpush1.msra.mxu0 0.0
    %1525 = vmatprep.subr.mxu0 0.0
    %1526 = vmatpush1.msra.mxu0 0.0
    %1527 = vmatprep.subr.mxu0 0.0
    %1528 = vmatpush1.msra.mxu0 0.0
    %1529 = vmatprep.subr.mxu0 0.0
    %1530 = vmatpush1.msra.mxu0 0.0
    %1531 = vmatprep.subr.mxu0 0.0
    %1532 = vmatpush1.msra.mxu0 0.0
    %1533 = vmatprep.subr.mxu0 0.0
    %1534 = vmatpush1.msra.mxu0 0.0
    %1535 = vmatprep.subr.mxu0 0.0
    %1536 = vmatpush1.msra.mxu0 0.0
    %1537 = vmatprep.subr.mxu0 0.0
    %1538 = vmatpush1.msra.mxu0 0.0
    %1539 = vmatprep.subr.mxu0 0.0
    %1540 = vmatpush1.msra.mxu0 0.0
    %1541 = vmatprep.subr.mxu0 0.0
    %1542 = vmatpush1.msra.mxu0 0.0
    %1543 = vmatprep.subr.mxu0 0.0
    %1544 = vmatpush1.msra.mxu0 0.0
    %1545 = vmatprep.subr.mxu0 0.0
    %1546 = vmatpush1.msra.mxu0 0.0
    %1547 = vmatprep.mubr.f32.mxu0 0.0
    %1548 = vmatmul.mubr.f32.gmra.mrb[0].mxu0 %v1475
    %v1549 = vpop.f32.mrb[0].mxu0
    %v1550 = vadd.f32 0.0, %v1549
    %v1551 = vpop.f32.mrb[0].mxu0
    %v1552 = vadd.f32 0.0, %v1551
    %1553 = vdwg.mxu0
    %1554 = vmatprep.subr.mxu0 %v534
    %1555 = vmatpush1.msra.mxu0 %v533
    %1556 = vmatprep.subr.mxu0 %v538
    %1557 = vmatpush1.msra.mxu0 %v537
    %1558 = vmatprep.subr.mxu0 %v542
    %1559 = vmatpush1.msra.mxu0 %v541
    %1560 = vmatprep.subr.mxu0 %v546
    %1561 = vmatpush1.msra.mxu0 %v545
    %1562 = vmatprep.subr.mxu0 %v550
    %1563 = vmatpush1.msra.mxu0 %v549
    %1564 = vmatprep.subr.mxu0 %v554
    %1565 = vmatpush1.msra.mxu0 %v553
    %1566 = vmatprep.subr.mxu0 %v558
    %1567 = vmatpush1.msra.mxu0 %v557
    %1568 = vmatprep.subr.mxu0 %v562
    %1569 = vmatpush1.msra.mxu0 %v561
    %1570 = vmatprep.subr.mxu0 %v566
    %1571 = vmatpush1.msra.mxu0 %v565
    %1572 = vmatprep.subr.mxu0 %v570
    %1573 = vmatpush1.msra.mxu0 %v569
    %1574 = vmatprep.subr.mxu0 %v574
    %1575 = vmatpush1.msra.mxu0 %v573
    %1576 = vmatprep.subr.mxu0 %v578
    %1577 = vmatpush1.msra.mxu0 %v577
    %1578 = vmatprep.subr.mxu0 %v582
    %1579 = vmatpush1.msra.mxu0 %v581
    %1580 = vmatprep.subr.mxu0 %v586
    %1581 = vmatpush1.msra.mxu0 %v585
    %1582 = vmatprep.subr.mxu0 %v590
    %1583 = vmatpush1.msra.mxu0 %v589
    %1584 = vmatprep.subr.mxu0 %v594
    %1585 = vmatpush1.msra.mxu0 %v593
    %1586 = vmatprep.subr.mxu0 0.0
    %1587 = vmatpush1.msra.mxu0 0.0
    %1588 = vmatprep.subr.mxu0 0.0
    %1589 = vmatpush1.msra.mxu0 0.0
    %1590 = vmatprep.subr.mxu0 0.0
    %1591 = vmatpush1.msra.mxu0 0.0
    %1592 = vmatprep.subr.mxu0 0.0
    %1593 = vmatpush1.msra.mxu0 0.0
    %1594 = vmatprep.subr.mxu0 0.0
    %1595 = vmatpush1.msra.mxu0 0.0
    %1596 = vmatprep.subr.mxu0 0.0
    %1597 = vmatpush1.msra.mxu0 0.0
    %1598 = vmatprep.subr.mxu0 0.0
    %1599 = vmatpush1.msra.mxu0 0.0
    %1600 = vmatprep.subr.mxu0 0.0
    %1601 = vmatpush1.msra.mxu0 0.0
    %1602 = vmatprep.subr.mxu0 0.0
    %1603 = vmatpush1.msra.mxu0 0.0
    %1604 = vmatprep.subr.mxu0 0.0
    %1605 = vmatpush1.msra.mxu0 0.0
    %1606 = vmatprep.subr.mxu0 0.0
    %1607 = vmatpush1.msra.mxu0 0.0
    %1608 = vmatprep.subr.mxu0 0.0
    %1609 = vmatpush1.msra.mxu0 0.0
    %1610 = vmatprep.subr.mxu0 0.0
    %1611 = vmatpush1.msra.mxu0 0.0
    %1612 = vmatprep.subr.mxu0 0.0
    %1613 = vmatpush1.msra.mxu0 0.0
    %1614 = vmatprep.subr.mxu0 0.0
    %1615 = vmatpush1.msra.mxu0 0.0
    %1616 = vmatprep.subr.mxu0 0.0
    %1617 = vmatpush1.msra.mxu0 0.0
    %1618 = vmatprep.mubr.f32.mxu0 0.0
    %1619 = vmatmul.mubr.f32.gmra.mrb[0].mxu0 %v1475
    %v1620 = vpop.f32.mrb[0].mxu0
    %v1621 = vadd.f32 0.0, %v1620
    %v1622 = vpop.f32.mrb[0].mxu0
    %v1623 = vadd.f32 0.0, %v1622
    %1624 = vdwg.mxu0
    %v1625 = vadd.f32 %v1479, %v1550
    %v1626 = vadd.f32 %v1480, %v1552
    %v1627 = vadd.f32 %v1481, %v1621
    %v1628 = vadd.f32 %v1482, %v1623
    %v1629 = vxor.u32 %v1625, 2147483648
    %v1630 = vmul.f32 %v1629, 1.442695
    %v1631 = vpow.pop %v1630
    %v1632 = vadd.f32 %v1631, 1.0
    %v1633 = vrcp.pop %v1632
    %v1634 = vmul.f32 1.0, %v1633
    %v1635 = vxor.u32 %v1626, 2147483648
    %v1636 = vmul.f32 %v1635, 1.442695
    %v1637 = vpow.pop %v1636
    %v1638 = vadd.f32 %v1637, 1.0
    %v1639 = vrcp.pop %v1638
    %v1640 = vmul.f32 1.0, %v1639
    %v1641 = vtanh.pop %v1627
    %v1642 = vxor.u32 %v1628, 2147483648
    %v1643 = vmul.f32 %v1642, 1.442695
    %v1644 = vpow.pop %v1643
    %v1645 = vadd.f32 %v1644, 1.0
    %v1646 = vrcp.pop %v1645
    %v1647 = vmul.f32 1.0, %v1646
    %v1648 = vmul.f32 %v1640, %v1473
    %v1649 = vmul.f32 %v1634, %v1641
    %v1650 = vadd.f32 %v1648, %v1649
    %v1651 = vtanh.pop %v1650
    %v1652 = vmul.f32 %v1647, %v1651
    %s1653 = scalar_lea.vmem [#allocation3], 40
    %1654 = vst [vmem:[%s1653] sm:$0xff] %v1652
    %s1655 = scalar_lea.vmem [#allocation2], 192
    %v1656 = vld [vmem:[%s1655] sm:$0xff]
    %v1657 = vld [vmem:[%s1655 + $0x8] sm:$0xff]
    %v1658 = vld [vmem:[%s1655 + $0x10] sm:$0xff]
    %v1659 = vld [vmem:[%s1655 + $0x18] sm:$0xff]
    %1660 = vmatprep.subr.mxu0 %v532
    %1661 = vmatpush1.msra.mxu0 %v531
    %1662 = vmatprep.subr.mxu0 %v536
    %1663 = vmatpush1.msra.mxu0 %v535
    %1664 = vmatprep.subr.mxu0 %v540
    %1665 = vmatpush1.msra.mxu0 %v539
    %1666 = vmatprep.subr.mxu0 %v544
    %1667 = vmatpush1.msra.mxu0 %v543
    %1668 = vmatprep.subr.mxu0 %v548
    %1669 = vmatpush1.msra.mxu0 %v547
    %1670 = vmatprep.subr.mxu0 %v552
    %1671 = vmatpush1.msra.mxu0 %v551
    %1672 = vmatprep.subr.mxu0 %v556
    %1673 = vmatpush1.msra.mxu0 %v555
    %1674 = vmatprep.subr.mxu0 %v560
    %1675 = vmatpush1.msra.mxu0 %v559
    %1676 = vmatprep.subr.mxu0 %v564
    %1677 = vmatpush1.msra.mxu0 %v563
    %1678 = vmatprep.subr.mxu0 %v568
    %1679 = vmatpush1.msra.mxu0 %v567
    %1680 = vmatprep.subr.mxu0 %v572
    %1681 = vmatpush1.msra.mxu0 %v571
    %1682 = vmatprep.subr.mxu0 %v576
    %1683 = vmatpush1.msra.mxu0 %v575
    %1684 = vmatprep.subr.mxu0 %v580
    %1685 = vmatpush1.msra.mxu0 %v579
    %1686 = vmatprep.subr.mxu0 %v584
    %1687 = vmatpush1.msra.mxu0 %v583
    %1688 = vmatprep.subr.mxu0 %v588
    %1689 = vmatpush1.msra.mxu0 %v587
    %1690 = vmatprep.subr.mxu0 %v592
    %1691 = vmatpush1.msra.mxu0 %v591
    %1692 = vmatprep.subr.mxu0 0.0
    %1693 = vmatpush1.msra.mxu0 0.0
    %1694 = vmatprep.subr.mxu0 0.0
    %1695 = vmatpush1.msra.mxu0 0.0
    %1696 = vmatprep.subr.mxu0 0.0
    %1697 = vmatpush1.msra.mxu0 0.0
    %1698 = vmatprep.subr.mxu0 0.0
    %1699 = vmatpush1.msra.mxu0 0.0
    %1700 = vmatprep.subr.mxu0 0.0
    %1701 = vmatpush1.msra.mxu0 0.0
    %1702 = vmatprep.subr.mxu0 0.0
    %1703 = vmatpush1.msra.mxu0 0.0
    %1704 = vmatprep.subr.mxu0 0.0
    %1705 = vmatpush1.msra.mxu0 0.0
    %1706 = vmatprep.subr.mxu0 0.0
    %1707 = vmatpush1.msra.mxu0 0.0
    %1708 = vmatprep.subr.mxu0 0.0
    %1709 = vmatpush1.msra.mxu0 0.0
    %1710 = vmatprep.subr.mxu0 0.0
    %1711 = vmatpush1.msra.mxu0 0.0
    %1712 = vmatprep.subr.mxu0 0.0
    %1713 = vmatpush1.msra.mxu0 0.0
    %1714 = vmatprep.subr.mxu0 0.0
    %1715 = vmatpush1.msra.mxu0 0.0
    %1716 = vmatprep.subr.mxu0 0.0
    %1717 = vmatpush1.msra.mxu0 0.0
    %1718 = vmatprep.subr.mxu0 0.0
    %1719 = vmatpush1.msra.mxu0 0.0
    %1720 = vmatprep.subr.mxu0 0.0
    %1721 = vmatpush1.msra.mxu0 0.0
    %1722 = vmatprep.subr.mxu0 0.0
    %1723 = vmatpush1.msra.mxu0 0.0
    %1724 = vmatprep.mubr.f32.mxu0 0.0
    %1725 = vmatmul.mubr.f32.gmra.mrb[0].mxu0 %v1652
    %v1726 = vpop.f32.mrb[0].mxu0
    %v1727 = vadd.f32 0.0, %v1726
    %v1728 = vpop.f32.mrb[0].mxu0
    %v1729 = vadd.f32 0.0, %v1728
    %1730 = vdwg.mxu0
    %1731 = vmatprep.subr.mxu0 %v534
    %1732 = vmatpush1.msra.mxu0 %v533
    %1733 = vmatprep.subr.mxu0 %v538
    %1734 = vmatpush1.msra.mxu0 %v537
    %1735 = vmatprep.subr.mxu0 %v542
    %1736 = vmatpush1.msra.mxu0 %v541
    %1737 = vmatprep.subr.mxu0 %v546
    %1738 = vmatpush1.msra.mxu0 %v545
    %1739 = vmatprep.subr.mxu0 %v550
    %1740 = vmatpush1.msra.mxu0 %v549
    %1741 = vmatprep.subr.mxu0 %v554
    %1742 = vmatpush1.msra.mxu0 %v553
    %1743 = vmatprep.subr.mxu0 %v558
    %1744 = vmatpush1.msra.mxu0 %v557
    %1745 = vmatprep.subr.mxu0 %v562
    %1746 = vmatpush1.msra.mxu0 %v561
    %1747 = vmatprep.subr.mxu0 %v566
    %1748 = vmatpush1.msra.mxu0 %v565
    %1749 = vmatprep.subr.mxu0 %v570
    %1750 = vmatpush1.msra.mxu0 %v569
    %1751 = vmatprep.subr.mxu0 %v574
    %1752 = vmatpush1.msra.mxu0 %v573
    %1753 = vmatprep.subr.mxu0 %v578
    %1754 = vmatpush1.msra.mxu0 %v577
    %1755 = vmatprep.subr.mxu0 %v582
    %1756 = vmatpush1.msra.mxu0 %v581
    %1757 = vmatprep.subr.mxu0 %v586
    %1758 = vmatpush1.msra.mxu0 %v585
    %1759 = vmatprep.subr.mxu0 %v590
    %1760 = vmatpush1.msra.mxu0 %v589
    %1761 = vmatprep.subr.mxu0 %v594
    %1762 = vmatpush1.msra.mxu0 %v593
    %1763 = vmatprep.subr.mxu0 0.0
    %1764 = vmatpush1.msra.mxu0 0.0
    %1765 = vmatprep.subr.mxu0 0.0
    %1766 = vmatpush1.msra.mxu0 0.0
    %1767 = vmatprep.subr.mxu0 0.0
    %1768 = vmatpush1.msra.mxu0 0.0
    %1769 = vmatprep.subr.mxu0 0.0
    %1770 = vmatpush1.msra.mxu0 0.0
    %1771 = vmatprep.subr.mxu0 0.0
    %1772 = vmatpush1.msra.mxu0 0.0
    %1773 = vmatprep.subr.mxu0 0.0
    %1774 = vmatpush1.msra.mxu0 0.0
    %1775 = vmatprep.subr.mxu0 0.0
    %1776 = vmatpush1.msra.mxu0 0.0
    %1777 = vmatprep.subr.mxu0 0.0
    %1778 = vmatpush1.msra.mxu0 0.0
    %1779 = vmatprep.subr.mxu0 0.0
    %1780 = vmatpush1.msra.mxu0 0.0
    %1781 = vmatprep.subr.mxu0 0.0
    %1782 = vmatpush1.msra.mxu0 0.0
    %1783 = vmatprep.subr.mxu0 0.0
    %1784 = vmatpush1.msra.mxu0 0.0
    %1785 = vmatprep.subr.mxu0 0.0
    %1786 = vmatpush1.msra.mxu0 0.0
    %1787 = vmatprep.subr.mxu0 0.0
    %1788 = vmatpush1.msra.mxu0 0.0
    %1789 = vmatprep.subr.mxu0 0.0
    %1790 = vmatpush1.msra.mxu0 0.0
    %1791 = vmatprep.subr.mxu0 0.0
    %1792 = vmatpush1.msra.mxu0 0.0
    %1793 = vmatprep.subr.mxu0 0.0
    %1794 = vmatpush1.msra.mxu0 0.0
    %1795 = vmatprep.mubr.f32.mxu0 0.0
    %1796 = vmatmul.mubr.f32.gmra.mrb[0].mxu0 %v1652
    %v1797 = vpop.f32.mrb[0].mxu0
    %v1798 = vadd.f32 0.0, %v1797
    %v1799 = vpop.f32.mrb[0].mxu0
    %v1800 = vadd.f32 0.0, %v1799
    %1801 = vdwg.mxu0
    %v1802 = vadd.f32 %v1656, %v1727
    %v1803 = vadd.f32 %v1657, %v1729
    %v1804 = vadd.f32 %v1658, %v1798
    %v1805 = vadd.f32 %v1659, %v1800
    %v1806 = vxor.u32 %v1802, 2147483648
    %v1807 = vmul.f32 %v1806, 1.442695
    %v1808 = vpow.pop %v1807
    %v1809 = vadd.f32 %v1808, 1.0
    %v1810 = vrcp.pop %v1809
    %v1811 = vmul.f32 1.0, %v1810
    %v1812 = vxor.u32 %v1803, 2147483648
    %v1813 = vmul.f32 %v1812, 1.442695
    %v1814 = vpow.pop %v1813
    %v1815 = vadd.f32 %v1814, 1.0
    %v1816 = vrcp.pop %v1815
    %v1817 = vmul.f32 1.0, %v1816
    %v1818 = vtanh.pop %v1804
    %v1819 = vxor.u32 %v1805, 2147483648
    %v1820 = vmul.f32 %v1819, 1.442695
    %v1821 = vpow.pop %v1820
    %v1822 = vadd.f32 %v1821, 1.0
    %v1823 = vrcp.pop %v1822
    %v1824 = vmul.f32 1.0, %v1823
    %v1825 = vmul.f32 %v1817, %v1650
    %v1826 = vmul.f32 %v1811, %v1818
    %v1827 = vadd.f32 %v1825, %v1826
    %v1828 = vtanh.pop %v1827
    %v1829 = vmul.f32 %v1824, %v1828
    %s1830 = scalar_lea.vmem [#allocation3], 48
    %1831 = vst [vmem:[%s1830] sm:$0xff] %v1829
    %s1832 = scalar_lea.vmem [#allocation2], 224
    %v1833 = vld [vmem:[%s1832] sm:$0xff]
    %v1834 = vld [vmem:[%s1832 + $0x8] sm:$0xff]
    %v1835 = vld [vmem:[%s1832 + $0x10] sm:$0xff]
    %v1836 = vld [vmem:[%s1832 + $0x18] sm:$0xff]
    %1837 = vmatprep.subr.mxu0 %v532
    %1838 = vmatpush1.msra.mxu0 %v531
    %1839 = vmatprep.subr.mxu0 %v536
    %1840 = vmatpush1.msra.mxu0 %v535
    %1841 = vmatprep.subr.mxu0 %v540
    %1842 = vmatpush1.msra.mxu0 %v539
    %1843 = vmatprep.subr.mxu0 %v544
    %1844 = vmatpush1.msra.mxu0 %v543
    %1845 = vmatprep.subr.mxu0 %v548
    %1846 = vmatpush1.msra.mxu0 %v547
    %1847 = vmatprep.subr.mxu0 %v552
    %1848 = vmatpush1.msra.mxu0 %v551
    %1849 = vmatprep.subr.mxu0 %v556
    %1850 = vmatpush1.msra.mxu0 %v555
    %1851 = vmatprep.subr.mxu0 %v560
    %1852 = vmatpush1.msra.mxu0 %v559
    %1853 = vmatprep.subr.mxu0 %v564
    %1854 = vmatpush1.msra.mxu0 %v563
    %1855 = vmatprep.subr.mxu0 %v568
    %1856 = vmatpush1.msra.mxu0 %v567
    %1857 = vmatprep.subr.mxu0 %v572
    %1858 = vmatpush1.msra.mxu0 %v571
    %1859 = vmatprep.subr.mxu0 %v576
    %1860 = vmatpush1.msra.mxu0 %v575
    %1861 = vmatprep.subr.mxu0 %v580
    %1862 = vmatpush1.msra.mxu0 %v579
    %1863 = vmatprep.subr.mxu0 %v584
    %1864 = vmatpush1.msra.mxu0 %v583
    %1865 = vmatprep.subr.mxu0 %v588
    %1866 = vmatpush1.msra.mxu0 %v587
    %1867 = vmatprep.subr.mxu0 %v592
    %1868 = vmatpush1.msra.mxu0 %v591
    %1869 = vmatprep.subr.mxu0 0.0
    %1870 = vmatpush1.msra.mxu0 0.0
    %1871 = vmatprep.subr.mxu0 0.0
    %1872 = vmatpush1.msra.mxu0 0.0
    %1873 = vmatprep.subr.mxu0 0.0
    %1874 = vmatpush1.msra.mxu0 0.0
    %1875 = vmatprep.subr.mxu0 0.0
    %1876 = vmatpush1.msra.mxu0 0.0
    %1877 = vmatprep.subr.mxu0 0.0
    %1878 = vmatpush1.msra.mxu0 0.0
    %1879 = vmatprep.subr.mxu0 0.0
    %1880 = vmatpush1.msra.mxu0 0.0
    %1881 = vmatprep.subr.mxu0 0.0
    %1882 = vmatpush1.msra.mxu0 0.0
    %1883 = vmatprep.subr.mxu0 0.0
    %1884 = vmatpush1.msra.mxu0 0.0
    %1885 = vmatprep.subr.mxu0 0.0
    %1886 = vmatpush1.msra.mxu0 0.0
    %1887 = vmatprep.subr.mxu0 0.0
    %1888 = vmatpush1.msra.mxu0 0.0
    %1889 = vmatprep.subr.mxu0 0.0
    %1890 = vmatpush1.msra.mxu0 0.0
    %1891 = vmatprep.subr.mxu0 0.0
    %1892 = vmatpush1.msra.mxu0 0.0
    %1893 = vmatprep.subr.mxu0 0.0
    %1894 = vmatpush1.msra.mxu0 0.0
    %1895 = vmatprep.subr.mxu0 0.0
    %1896 = vmatpush1.msra.mxu0 0.0
    %1897 = vmatprep.subr.mxu0 0.0
    %1898 = vmatpush1.msra.mxu0 0.0
    %1899 = vmatprep.subr.mxu0 0.0
    %1900 = vmatpush1.msra.mxu0 0.0
    %1901 = vmatprep.mubr.f32.mxu0 0.0
    %1902 = vmatmul.mubr.f32.gmra.mrb[0].mxu0 %v1829
    %v1903 = vpop.f32.mrb[0].mxu0
    %v1904 = vadd.f32 0.0, %v1903
    %v1905 = vpop.f32.mrb[0].mxu0
    %v1906 = vadd.f32 0.0, %v1905
    %1907 = vdwg.mxu0
    %1908 = vmatprep.subr.mxu0 %v534
    %1909 = vmatpush1.msra.mxu0 %v533
    %1910 = vmatprep.subr.mxu0 %v538
    %1911 = vmatpush1.msra.mxu0 %v537
    %1912 = vmatprep.subr.mxu0 %v542
    %1913 = vmatpush1.msra.mxu0 %v541
    %1914 = vmatprep.subr.mxu0 %v546
    %1915 = vmatpush1.msra.mxu0 %v545
    %1916 = vmatprep.subr.mxu0 %v550
    %1917 = vmatpush1.msra.mxu0 %v549
    %1918 = vmatprep.subr.mxu0 %v554
    %1919 = vmatpush1.msra.mxu0 %v553
    %1920 = vmatprep.subr.mxu0 %v558
    %1921 = vmatpush1.msra.mxu0 %v557
    %1922 = vmatprep.subr.mxu0 %v562
    %1923 = vmatpush1.msra.mxu0 %v561
    %1924 = vmatprep.subr.mxu0 %v566
    %1925 = vmatpush1.msra.mxu0 %v565
    %1926 = vmatprep.subr.mxu0 %v570
    %1927 = vmatpush1.msra.mxu0 %v569
    %1928 = vmatprep.subr.mxu0 %v574
    %1929 = vmatpush1.msra.mxu0 %v573
    %1930 = vmatprep.subr.mxu0 %v578
    %1931 = vmatpush1.msra.mxu0 %v577
    %1932 = vmatprep.subr.mxu0 %v582
    %1933 = vmatpush1.msra.mxu0 %v581
    %1934 = vmatprep.subr.mxu0 %v586
    %1935 = vmatpush1.msra.mxu0 %v585
    %1936 = vmatprep.subr.mxu0 %v590
    %1937 = vmatpush1.msra.mxu0 %v589
    %1938 = vmatprep.subr.mxu0 %v594
    %1939 = vmatpush1.msra.mxu0 %v593
    %1940 = vmatprep.subr.mxu0 0.0
    %1941 = vmatpush1.msra.mxu0 0.0
    %1942 = vmatprep.subr.mxu0 0.0
    %1943 = vmatpush1.msra.mxu0 0.0
    %1944 = vmatprep.subr.mxu0 0.0
    %1945 = vmatpush1.msra.mxu0 0.0
    %1946 = vmatprep.subr.mxu0 0.0
    %1947 = vmatpush1.msra.mxu0 0.0
    %1948 = vmatprep.subr.mxu0 0.0
    %1949 = vmatpush1.msra.mxu0 0.0
    %1950 = vmatprep.subr.mxu0 0.0
    %1951 = vmatpush1.msra.mxu0 0.0
    %1952 = vmatprep.subr.mxu0 0.0
    %1953 = vmatpush1.msra.mxu0 0.0
    %1954 = vmatprep.subr.mxu0 0.0
    %1955 = vmatpush1.msra.mxu0 0.0
    %1956 = vmatprep.subr.mxu0 0.0
    %1957 = vmatpush1.msra.mxu0 0.0
    %1958 = vmatprep.subr.mxu0 0.0
    %1959 = vmatpush1.msra.mxu0 0.0
    %1960 = vmatprep.subr.mxu0 0.0
    %1961 = vmatpush1.msra.mxu0 0.0
    %1962 = vmatprep.subr.mxu0 0.0
    %1963 = vmatpush1.msra.mxu0 0.0
    %1964 = vmatprep.subr.mxu0 0.0
    %1965 = vmatpush1.msra.mxu0 0.0
    %1966 = vmatprep.subr.mxu0 0.0
    %1967 = vmatpush1.msra.mxu0 0.0
    %1968 = vmatprep.subr.mxu0 0.0
    %1969 = vmatpush1.msra.mxu0 0.0
    %1970 = vmatprep.subr.mxu0 0.0
    %1971 = vmatpush1.msra.mxu0 0.0
    %1972 = vmatprep.mubr.f32.mxu0 0.0
    %1973 = vmatmul.mubr.f32.gmra.mrb[0].mxu0 %v1829
    %v1974 = vpop.f32.mrb[0].mxu0
    %v1975 = vadd.f32 0.0, %v1974
    %v1976 = vpop.f32.mrb[0].mxu0
    %v1977 = vadd.f32 0.0, %v1976
    %1978 = vdwg.mxu0
    %v1979 = vadd.f32 %v1833, %v1904
    %v1980 = vadd.f32 %v1834, %v1906
    %v1981 = vadd.f32 %v1835, %v1975
    %v1982 = vadd.f32 %v1836, %v1977
    %v1983 = vxor.u32 %v1979, 2147483648
    %v1984 = vmul.f32 %v1983, 1.442695
    %v1985 = vpow.pop %v1984
    %v1986 = vadd.f32 %v1985, 1.0
    %v1987 = vrcp.pop %v1986
    %v1988 = vmul.f32 1.0, %v1987
    %v1989 = vxor.u32 %v1980, 2147483648
    %v1990 = vmul.f32 %v1989, 1.442695
    %v1991 = vpow.pop %v1990
    %v1992 = vadd.f32 %v1991, 1.0
    %v1993 = vrcp.pop %v1992
    %v1994 = vmul.f32 1.0, %v1993
    %v1995 = vtanh.pop %v1981
    %v1996 = vxor.u32 %v1982, 2147483648
    %v1997 = vmul.f32 %v1996, 1.442695
    %v1998 = vpow.pop %v1997
    %v1999 = vadd.f32 %v1998, 1.0
    %v2000 = vrcp.pop %v1999
    %v2001 = vmul.f32 1.0, %v2000
    %v2002 = vmul.f32 %v1994, %v1827
    %v2003 = vmul.f32 %v1988, %v1995
    %v2004 = vadd.f32 %v2002, %v2003
    %v2005 = vtanh.pop %v2004
    %v2006 = vmul.f32 %v2001, %v2005
    %s2007 = scalar_lea.vmem [#allocation3], 56
    %2008 = vst [vmem:[%s2007] sm:$0xff] %v2006
    %v2009 = vld [vmem:[#allocation3] sm:$0xff]
    %v2010 = vld [vmem:[#allocation3 + $0x8] sm:$0xff]
    %v2011 = vld [vmem:[#allocation3 + $0x10] sm:$0xff]
    %v2012 = vld [vmem:[#allocation3 + $0x18] sm:$0xff]
    %v2013 = vld [vmem:[#allocation3 + $0x20] sm:$0xff]
    %v2014 = vld [vmem:[#allocation3 + $0x28] sm:$0xff]
    %v2015 = vld [vmem:[#allocation3 + $0x30] sm:$0xff]
    %v2016 = vld [vmem:[#allocation3 + $0x38] sm:$0xff]
    %v2017 = vld [vmem:[%s6] sm:$0xff]
    %v2018 = vld [vmem:[%s6 + $0x8] sm:$0xff]
    %v2019 = vld [vmem:[%s6 + $0x10] sm:$0xff]
    %v2020 = vld [vmem:[%s6 + $0x18] sm:$0xff]
    %v2021 = vld [vmem:[%s6 + $0x20] sm:$0xff]
    %v2022 = vld [vmem:[%s6 + $0x28] sm:$0xff]
    %v2023 = vld [vmem:[%s6 + $0x30] sm:$0xff]
    %v2024 = vld [vmem:[%s6 + $0x38] sm:$0xff]
    %v2025 = vld [vmem:[%s6 + $0x40] sm:$0xff]
    %v2026 = vld [vmem:[%s6 + $0x48] sm:$0xff]
    %v2027 = vld [vmem:[%s6 + $0x50] sm:$0xff]
    %v2028 = vld [vmem:[%s6 + $0x58] sm:$0xff]
    %v2029 = vld [vmem:[%s6 + $0x60] sm:$0xff]
    %v2030 = vld [vmem:[%s6 + $0x68] sm:$0xff]
    %v2031 = vld [vmem:[%s6 + $0x70] sm:$0xff]
    %v2032 = vld [vmem:[%s6 + $0x78] sm:$0xff]
    %v2033 = vld [vmem:[%s7] sm:$0x1]
    %v2035 = vlaneseq
    %v2036 = vshrl.u32 %v2035, 7
    %v2037 = vsub.s32 0, %v2036
    %v2038 = vrot.slane %v2033, %v2037
    %2040 = vmatprep.subr.mxu0 0.0
    %2041 = vmatpush1.msra.mxu0 %v2017
    %2042 = vmatprep.subr.mxu0 0.0
    %2043 = vmatpush1.msra.mxu0 %v2018
    %2044 = vmatprep.subr.mxu0 0.0
    %2045 = vmatpush1.msra.mxu0 %v2019
    %2046 = vmatprep.subr.mxu0 0.0
    %2047 = vmatpush1.msra.mxu0 %v2020
    %2048 = vmatprep.subr.mxu0 0.0
    %2049 = vmatpush1.msra.mxu0 %v2021
    %2050 = vmatprep.subr.mxu0 0.0
    %2051 = vmatpush1.msra.mxu0 %v2022
    %2052 = vmatprep.subr.mxu0 0.0
    %2053 = vmatpush1.msra.mxu0 %v2023
    %2054 = vmatprep.subr.mxu0 0.0
    %2055 = vmatpush1.msra.mxu0 %v2024
    %2056 = vmatprep.subr.mxu0 0.0
    %2057 = vmatpush1.msra.mxu0 %v2025
    %2058 = vmatprep.subr.mxu0 0.0
    %2059 = vmatpush1.msra.mxu0 %v2026
    %2060 = vmatprep.subr.mxu0 0.0
    %2061 = vmatpush1.msra.mxu0 %v2027
    %2062 = vmatprep.subr.mxu0 0.0
    %2063 = vmatpush1.msra.mxu0 %v2028
    %2064 = vmatprep.subr.mxu0 0.0
    %2065 = vmatpush1.msra.mxu0 %v2029
    %2066 = vmatprep.subr.mxu0 0.0
    %2067 = vmatpush1.msra.mxu0 %v2030
    %2068 = vmatprep.subr.mxu0 0.0
    %2069 = vmatpush1.msra.mxu0 %v2031
    %2070 = vmatprep.subr.mxu0 0.0
    %2071 = vmatpush1.msra.mxu0 %v2032
    %2072 = vmatprep.subr.mxu0 0.0
    %2073 = vmatpush1.msra.mxu0 0.0
    %2074 = vmatprep.subr.mxu0 0.0
    %2075 = vmatpush1.msra.mxu0 0.0
    %2076 = vmatprep.subr.mxu0 0.0
    %2077 = vmatpush1.msra.mxu0 0.0
    %2078 = vmatprep.subr.mxu0 0.0
    %2079 = vmatpush1.msra.mxu0 0.0
    %2080 = vmatprep.subr.mxu0 0.0
    %2081 = vmatpush1.msra.mxu0 0.0
    %2082 = vmatprep.subr.mxu0 0.0
    %2083 = vmatpush1.msra.mxu0 0.0
    %2084 = vmatprep.subr.mxu0 0.0
    %2085 = vmatpush1.msra.mxu0 0.0
    %2086 = vmatprep.subr.mxu0 0.0
    %2087 = vmatpush1.msra.mxu0 0.0
    %2088 = vmatprep.subr.mxu0 0.0
    %2089 = vmatpush1.msra.mxu0 0.0
    %2090 = vmatprep.subr.mxu0 0.0
    %2091 = vmatpush1.msra.mxu0 0.0
    %2092 = vmatprep.subr.mxu0 0.0
    %2093 = vmatpush1.msra.mxu0 0.0
    %2094 = vmatprep.subr.mxu0 0.0
    %2095 = vmatpush1.msra.mxu0 0.0
    %2096 = vmatprep.subr.mxu0 0.0
    %2097 = vmatpush1.msra.mxu0 0.0
    %2098 = vmatprep.subr.mxu0 0.0
    %2099 = vmatpush1.msra.mxu0 0.0
    %2100 = vmatprep.subr.mxu0 0.0
    %2101 = vmatpush1.msra.mxu0 0.0
    %2102 = vmatprep.subr.mxu0 0.0
    %2103 = vmatpush1.msra.mxu0 0.0
    %2104 = vmatprep.mubr.f32.mxu0 0.0
    %2105 = vmatmul.mubr.f32.gmra.mrb[0].mxu0 %v2009
    %v2106 = vpop.f32.mrb[0].mxu0
    %v2107 = vadd.f32 %v2038, %v2106
    %v2108 = vpop.f32.mrb[0].mxu0
    %2109 = vmatprep.mubr.f32.mxu0 0.0
    %2110 = vmatmul.mubr.f32.gmra.mrb[0].mxu0 %v2010
    %v2111 = vpop.f32.mrb[0].mxu0
    %v2112 = vadd.f32 %v2038, %v2111
    %v2113 = vpop.f32.mrb[0].mxu0
    %2114 = vmatprep.mubr.f32.mxu0 0.0
    %2115 = vmatmul.mubr.f32.gmra.mrb[0].mxu0 %v2011
    %v2116 = vpop.f32.mrb[0].mxu0
    %v2117 = vadd.f32 %v2038, %v2116
    %v2118 = vpop.f32.mrb[0].mxu0
    %2119 = vmatprep.mubr.f32.mxu0 0.0
    %2120 = vmatmul.mubr.f32.gmra.mrb[0].mxu0 %v2012
    %v2121 = vpop.f32.mrb[0].mxu0
    %v2122 = vadd.f32 %v2038, %v2121
    %v2123 = vpop.f32.mrb[0].mxu0
    %2124 = vmatprep.mubr.f32.mxu0 0.0
    %2125 = vmatmul.mubr.f32.gmra.mrb[0].mxu0 %v2013
    %v2126 = vpop.f32.mrb[0].mxu0
    %v2127 = vadd.f32 %v2038, %v2126
    %v2128 = vpop.f32.mrb[0].mxu0
    %2129 = vmatprep.mubr.f32.mxu0 0.0
    %2130 = vmatmul.mubr.f32.gmra.mrb[0].mxu0 %v2014
    %v2131 = vpop.f32.mrb[0].mxu0
    %v2132 = vadd.f32 %v2038, %v2131
    %v2133 = vpop.f32.mrb[0].mxu0
    %2134 = vmatprep.mubr.f32.mxu0 0.0
    %2135 = vmatmul.mubr.f32.gmra.mrb[0].mxu0 %v2015
    %v2136 = vpop.f32.mrb[0].mxu0
    %v2137 = vadd.f32 %v2038, %v2136
    %v2138 = vpop.f32.mrb[0].mxu0
    %2139 = vmatprep.mubr.f32.mxu0 0.0
    %2140 = vmatmul.mubr.f32.gmra.mrb[0].mxu0 %v2016
    %v2141 = vpop.f32.mrb[0].mxu0
    %v2142 = vadd.f32 %v2038, %v2141
    %v2143 = vpop.f32.mrb[0].mxu0
    %2144 = vdwg.mxu0
    %2145 = vst [vmem:[%s8] sm:$0xff] %v2107
    %2146 = vst [vmem:[%s8 + $0x8] sm:$0xff] %v2112
    %2147 = vst [vmem:[%s8 + $0x10] sm:$0xff] %v2117
    %2148 = vst [vmem:[%s8 + $0x18] sm:$0xff] %v2122
    %2149 = vst [vmem:[%s8 + $0x20] sm:$0xff] %v2127
    %2150 = vst [vmem:[%s8 + $0x28] sm:$0xff] %v2132
    %2151 = vst [vmem:[%s8 + $0x30] sm:$0xff] %v2137
    %2152 = vst [vmem:[%s8 + $0x38] sm:$0xff] %v2142
    // Predicated region
    $region38: #{gesture_recognition_forward.1} parent=1 // pred_check
      _
    $region39: #{gesture_recognition_forward.1} parent=1 // pred_check_branch
      %2154 = sbr.rel (0) target = $region41
    $region40: #{gesture_recognition_forward.1} parent=1 // pred_region
      _
    $region41: #{gesture_recognition_forward.1} parent=1 // pred_fallthru
      _
    // Predicated region
    $region42: #{gesture_recognition_forward.1} parent=1 // pred_check
      _
    $region43: #{gesture_recognition_forward.1} parent=1 // pred_check_branch
      %2156 = sbr.rel (0) target = $region45
    $region44: #{gesture_recognition_forward.1} parent=1 // pred_region
      _
    $region45: #{gesture_recognition_forward.1} parent=1 // pred_fallthru
      _
    %2157 = vsyncpa [#allocation5], 1

</llo_original>
